<compile_context>
chip_gen: v5e
topology: v5e:2x2
jax: 0.10.0
libtpu: 0.0.40
codegen_flags: <defaults>
</compile_context>

<pallas_src>
import math
import functools

import jax
import jax.numpy as jnp
from jax.experimental import pallas as pl
from jax.experimental.pallas import tpu as pltpu

# ---------------- model config (mirrors the PyTorch module) ----------------
D_MODEL = 16
D_HID = 16
N_HEAD = 2
N_LAYERS = 2
D_HEAD = D_MODEL // N_HEAD
LN_EPS = 1e-5

# packing order of per-layer d_model-wide vectors inside "lvec"
_AO_B, _LN1_W, _LN1_B, _LN2_W, _LN2_B, _FF2_B = range(6)


# ------------------------------ Pallas kernel ------------------------------
def _transformer_kernel(src_ref, pe_ref, win_w_ref, win_b_ref,
                        qkv_w_ref, qkv_b_ref, ao_w_ref, lvec_ref,
                        ff1_w_ref, ff1_b_ref, ff2_w_ref,
                        wout_w_ref, wout_b_ref, out_ref,
                        *, n_head, n_layers, tb, s_len):
    rows = tb * s_len

    def layernorm(z, w, b):
        mu = jnp.mean(z, axis=-1, keepdims=True)
        var = jnp.mean((z - mu) ** 2, axis=-1, keepdims=True)
        return (z - mu) * jax.lax.rsqrt(var + LN_EPS) * w + b

    # linear_in over the whole (TB*S, n_dirs) tile; weights are (in, out).
    x = jnp.dot(src_ref[...], win_w_ref[...], preferred_element_type=jnp.float32)
    x = x + win_b_ref[...] + pe_ref[...]                  # (rows, d_model)
    d_model = x.shape[-1]
    d_head = d_model // n_head

    for l in range(n_layers):
        # ---- multi-head self-attention (post-norm, PyTorch defaults) ----
        # Q weights/bias pre-scaled by 1/sqrt(d_head); per-head weight slices
        # pre-split in the wrapper so there is no lane slicing / concat here.
        attn = None
        for h in range(n_head):
            q = jnp.dot(x, qkv_w_ref[l, 0, h],
                        preferred_element_type=jnp.float32) + qkv_b_ref[l, 0, h]
            k = jnp.dot(x, qkv_w_ref[l, 1, h],
                        preferred_element_type=jnp.float32) + qkv_b_ref[l, 1, h]
            v = jnp.dot(x, qkv_w_ref[l, 2, h],
                        preferred_element_type=jnp.float32) + qkv_b_ref[l, 2, h]
            q3 = q.reshape(tb, s_len, d_head)
            k3 = k.reshape(tb, s_len, d_head)
            v3 = v.reshape(tb, s_len, d_head)
            s = jnp.einsum('bqd,bkd->bqk', q3, k3,
                           preferred_element_type=jnp.float32)    # (tb, S, S)
            s = s - jnp.max(s, axis=-1, keepdims=True)
            p = jnp.exp(s)
            p = p * pl.reciprocal(jnp.sum(p, axis=-1, keepdims=True), approx=True)
            o = jnp.einsum('bqk,bkd->bqd', p, v3,
                           preferred_element_type=jnp.float32)    # (tb, S, dh)
            ho = jnp.dot(o.reshape(rows, d_head), ao_w_ref[l, h],
                         preferred_element_type=jnp.float32)      # (rows, d_model)
            attn = ho if attn is None else attn + ho
        attn = attn + lvec_ref[l, _AO_B]
        x = layernorm(x + attn, lvec_ref[l, _LN1_W], lvec_ref[l, _LN1_B])

        # ---- feed-forward (ReLU) ----
        hid = jnp.dot(x, ff1_w_ref[l],
                      preferred_element_type=jnp.float32) + ff1_b_ref[l]
        hid = jnp.maximum(hid, 0.0)
        ff = jnp.dot(hid, ff2_w_ref[l],
                     preferred_element_type=jnp.float32) + lvec_ref[l, _FF2_B]
        x = layernorm(x + ff, lvec_ref[l, _LN2_W], lvec_ref[l, _LN2_B])

    # linear_out
    y = jnp.dot(x, wout_w_ref[...], preferred_element_type=jnp.float32)
    out_ref[...] = y + wout_b_ref[...]


# --------------------- wrapper-side parameter packing ----------------------
def _pack_params(p, n_head):
    """Pre-transpose / per-head split / Q pre-scale / pack small vectors."""
    d_model = p["win_w"].shape[0]
    d_head = d_model // n_head
    L = p["qkv_w"].shape[0]
    d_hid = p["ff1_w"].shape[1]
    scale = 1.0 / math.sqrt(d_head)

    # qkv: (L, 3*d, d) [out, in] -> (L, 3, H, in=d_model, out=d_head)
    w = p["qkv_w"].reshape(L, 3, d_model, d_model)
    w = jnp.swapaxes(w, -1, -2)                        # (L, 3, in, out)
    w = w.reshape(L, 3, d_model, n_head, d_head)
    w = jnp.transpose(w, (0, 1, 3, 2, 4))              # (L, 3, H, d_model, d_head)
    b = p["qkv_b"].reshape(L, 3, n_head, d_head)[:, :, :, None, :]
    w = w.at[:, 0].multiply(scale)                     # fold 1/sqrt(d_head) into Q
    b = b.at[:, 0].multiply(scale)

    # out-proj: (L, d, d) [out, in] -> per-head (L, H, d_head, d_model)
    ao = jnp.swapaxes(p["ao_w"], -1, -2)               # (L, in, out)
    ao = ao.reshape(L, n_head, d_head, d_model)

    lvec = jnp.stack([p["ao_b"], p["ln1_w"], p["ln1_b"],
                      p["ln2_w"], p["ln2_b"], p["ff2_b"]], axis=1)
    lvec = lvec[:, :, None, :]                         # (L, 6, 1, d_model)

    return dict(
        win_w=p["win_w"].T,                            # (n_dirs, d_model)
        win_b=p["win_b"].reshape(1, d_model),
        qkv_w=w, qkv_b=b, ao_w=ao, lvec=lvec,
        ff1_w=jnp.swapaxes(p["ff1_w"], -1, -2),        # (L, d_model, d_hid)
        ff1_b=p["ff1_b"].reshape(L, 1, d_hid),
        ff2_w=jnp.swapaxes(p["ff2_w"], -1, -2),        # (L, d_hid, d_model)
        wout_w=p["wout_w"].T,                          # (d_model, n_landmarks)
        wout_b=p["wout_b"].reshape(1, -1),
    )


def transformer_forward(src, params, *, n_head=N_HEAD, batch_tile=None):
    """src: (B, S, n_dirs) float32 -> (B, S, n_landmarks) float32."""
    src = jnp.asarray(src, jnp.float32)
    B, S, n_dirs = src.shape

    kp = _pack_params(params, n_head)
    n_landmarks = kp["wout_w"].shape[1]
    L = kp["qkv_w"].shape[0]

    # Batch folding: ~512 token rows per grid step (good MXU M on v5e/v6e/v7x);
    # many tiles on a "parallel" axis feed both v7x TensorCores; per-tile VMEM
    # stays far below v7x's 64 MiB.
    if batch_tile is None:
        tb = min(B, max(1, 512 // max(S, 1)))
    else:
        tb = min(batch_tile, B)
    if tb < B and (tb * S) % 8 != 0:
        tb = B                                   # keep row blocks sublane-aligned
    nb = -(-B // tb)
    b_pad = nb * tb
    if b_pad != B:
        src = jnp.concatenate(
            [src, jnp.zeros((b_pad - B, S, n_dirs), src.dtype)], axis=0)

    src2d = src.reshape(b_pad * S, n_dirs)
    pe = jnp.tile(jnp.asarray(params["pe"][:S], jnp.float32), (tb, 1))  # (tb*S, d)

    kernel = functools.partial(_transformer_kernel, n_head=n_head,
                               n_layers=L, tb=tb, s_len=S)

    def rep(shape):   # full-array block, constant index map (fetched once)
        return pl.BlockSpec(shape, lambda i, n=len(shape): (0,) * n)

    rows = tb * S
    grid_spec = pltpu.PrefetchScalarGridSpec(
        num_scalar_prefetch=0,
        grid=(nb,),
        in_specs=[
            pl.BlockSpec((rows, n_dirs), lambda i: (i, 0)),        # src tile
            rep(pe.shape),
            rep(kp["win_w"].shape), rep(kp["win_b"].shape),
            rep(kp["qkv_w"].shape), rep(kp["qkv_b"].shape),
            rep(kp["ao_w"].shape), rep(kp["lvec"].shape),
            rep(kp["ff1_w"].shape), rep(kp["ff1_b"].shape),
            rep(kp["ff2_w"].shape),
            rep(kp["wout_w"].shape), rep(kp["wout_b"].shape),
        ],
        out_specs=pl.BlockSpec((rows, n_landmarks), lambda i: (i, 0)),
    )

    out2d = pl.pallas_call(
        kernel,
        out_shape=jax.ShapeDtypeStruct((b_pad * S, n_landmarks), jnp.float32),
        grid_spec=grid_spec,
        compiler_params=pltpu.CompilerParams(dimension_semantics=("parallel",)),
    )(src2d, pe,
      kp["win_w"], kp["win_b"], kp["qkv_w"], kp["qkv_b"], kp["ao_w"], kp["lvec"],
      kp["ff1_w"], kp["ff1_b"], kp["ff2_w"], kp["wout_w"], kp["wout_b"])

    return out2d.reshape(b_pad, S, n_landmarks)[:B]


# ------------------------- parameter initialization -------------------------
def init_params(key, n_landmarks, n_dirs, d_model, d_hid, n_layers, s_len=64):
    ks = list(jax.random.split(key, 10))
    u = lambda k, shape, r: jax.random.uniform(k, shape, jnp.float32, -r, r)

    params = {
        # linear_in / linear_out: uniform(-0.1, 0.1) weight, zero bias (init_weights)
        "win_w": u(ks[0], (d_model, n_dirs), 0.1),
        "win_b": jnp.zeros((d_model,), jnp.float32),
        "wout_w": u(ks[1], (n_landmarks, d_model), 0.1),
        "wout_b": jnp.zeros((n_landmarks,), jnp.float32),
        # encoder layers (small deterministic uniform init, non-zero biases)
        "qkv_w": u(ks[2], (n_layers, 3 * d_model, d_model), 0.2),
        "qkv_b": u(ks[3], (n_layers, 3 * d_model), 0.05),
        "ao_w": u(ks[4], (n_layers, d_model, d_model), 0.2),
        "ao_b": u(ks[5], (n_layers, d_model), 0.05),
        "ff1_w": u(ks[6], (n_layers, d_hid, d_model), 0.2),
        "ff1_b": u(ks[7], (n_layers, d_hid), 0.05),
        "ff2_w": u(ks[8], (n_layers, d_model, d_hid), 0.2),
        "ff2_b": u(ks[9], (n_layers, d_model), 0.05),
        "ln1_w": jnp.ones((n_layers, d_model), jnp.float32),
        "ln1_b": jnp.zeros((n_layers, d_model), jnp.float32),
        "ln2_w": jnp.ones((n_layers, d_model), jnp.float32),
        "ln2_b": jnp.zeros((n_layers, d_model), jnp.float32),
    }

    # sinusoidal positional encoding buffer
    pos = jnp.arange(s_len, dtype=jnp.float32)[:, None]
    div = jnp.exp(jnp.arange(0, d_model, 2, dtype=jnp.float32)
                  * (-math.log(10000.0) / d_model))
    pe = jnp.zeros((s_len, d_model), jnp.float32)
    pe = pe.at[:, 0::2].set(jnp.sin(pos * div))
    pe = pe.at[:, 1::2].set(jnp.cos(pos * div))
    params["pe"] = pe
    return params


# ---------------------------- pure-JAX reference ----------------------------
def reference_forward(src, params):
    x = src @ params["win_w"].T + params["win_b"]
    x = x + params["pe"][: src.shape[1]][None]
    L = params["qkv_w"].shape[0]
    d = x.shape[-1]
    for l in range(L):
        qkv = x @ params["qkv_w"][l].T + params["qkv_b"][l]
        q, k, v = qkv[..., :d], qkv[..., d:2 * d], qkv[..., 2 * d:]
        B, S, _ = q.shape
        q = q.reshape(B, S, N_HEAD, D_HEAD).transpose(0, 2, 1, 3)
        k = k.reshape(B, S, N_HEAD, D_HEAD).transpose(0, 2, 1, 3)
        v = v.reshape(B, S, N_HEAD, D_HEAD).transpose(0, 2, 1, 3)
        s = (q @ k.transpose(0, 1, 3, 2)) / math.sqrt(D_HEAD)
        p = jax.nn.softmax(s, axis=-1)
        a = (p @ v).transpose(0, 2, 1, 3).reshape(B, S, d)
        a = a @ params["ao_w"][l].T + params["ao_b"][l]
        x = x + a
        mu = x.mean(-1, keepdims=True)
        var = ((x - mu) ** 2).mean(-1, keepdims=True)
        x = (x - mu) / jnp.sqrt(var + LN_EPS) * params["ln1_w"][l] + params["ln1_b"][l]
        h = jax.nn.relu(x @ params["ff1_w"][l].T + params["ff1_b"][l])
        f = h @ params["ff2_w"][l].T + params["ff2_b"][l]
        x = x + f
        mu = x.mean(-1, keepdims=True)
        var = ((x - mu) ** 2).mean(-1, keepdims=True)
        x = (x - mu) / jnp.sqrt(var + LN_EPS) * params["ln2_w"][l] + params["ln2_b"][l]
    return x @ params["wout_w"].T + params["wout_b"]


if __name__ == "__main__":
    B, S, N_DIRS, N_LANDMARKS = 2, 8, 4, 8

    key = jax.random.PRNGKey(0)
    k_param, k_src = jax.random.split(key)
    params = init_params(k_param, N_LANDMARKS, N_DIRS, D_MODEL, D_HID, N_LAYERS)
    src = jax.random.normal(k_src, (B, S, N_DIRS), jnp.float32)

    out = transformer_forward(src, params)
    out = jax.block_until_ready(out)

    ref = reference_forward(src, params)
    assert out.shape == (B, S, N_LANDMARKS)
    max_err = float(jnp.max(jnp.abs(out - ref)))
    # approx-reciprocal softmax -> slightly looser tolerance than exact division
    assert jnp.allclose(out, ref, atol=2e-3, rtol=2e-3), f"mismatch vs reference ({max_err})"

    print("KERNEL_OK")
</pallas_src>

<mosaic_0001>
module attributes {stable_mosaic.version = 11 : i64} {
  func.func @_transformer_kernel(%arg0: i32, %arg1: memref<16x4xf32, #tpu.memory_space<vmem>>, %arg2: memref<16x16xf32, #tpu.memory_space<vmem>>, %arg3: memref<4x16xf32, #tpu.memory_space<vmem>>, %arg4: memref<1x16xf32, #tpu.memory_space<vmem>>, %arg5: memref<2x3x2x16x8xf32, #tpu.memory_space<vmem>>, %arg6: memref<2x3x2x1x8xf32, #tpu.memory_space<vmem>>, %arg7: memref<2x2x8x16xf32, #tpu.memory_space<vmem>>, %arg8: memref<2x6x1x16xf32, #tpu.memory_space<vmem>>, %arg9: memref<2x16x16xf32, #tpu.memory_space<vmem>>, %arg10: memref<2x1x16xf32, #tpu.memory_space<vmem>>, %arg11: memref<2x16x16xf32, #tpu.memory_space<vmem>>, %arg12: memref<16x8xf32, #tpu.memory_space<vmem>>, %arg13: memref<1x8xf32, #tpu.memory_space<vmem>>, %arg14: memref<16x8xf32, #tpu.memory_space<vmem>>) attributes {dimension_semantics = [#tpu.dimension_semantics<parallel>], iteration_bounds = array<i64: 1>, scalar_prefetch = 0 : i64, scratch_operands = 0 : i64, tpu.core_type = #tpu.core_type<tc>, window_params = [{transform_indices = @transform_0, window_bounds = array<i64: 16, 4>}, {pipeline_mode = #tpu.pipeline_mode<synchronous>, transform_indices = @transform_1, window_bounds = array<i64: 16, 16>}, {pipeline_mode = #tpu.pipeline_mode<synchronous>, transform_indices = @transform_2, window_bounds = array<i64: 4, 16>}, {pipeline_mode = #tpu.pipeline_mode<synchronous>, transform_indices = @transform_3, window_bounds = array<i64: 1, 16>}, {pipeline_mode = #tpu.pipeline_mode<synchronous>, transform_indices = @transform_4, window_bounds = array<i64: 2, 3, 2, 16, 8>}, {pipeline_mode = #tpu.pipeline_mode<synchronous>, transform_indices = @transform_5, window_bounds = array<i64: 2, 3, 2, 1, 8>}, {pipeline_mode = #tpu.pipeline_mode<synchronous>, transform_indices = @transform_6, window_bounds = array<i64: 2, 2, 8, 16>}, {pipeline_mode = #tpu.pipeline_mode<synchronous>, transform_indices = @transform_7, window_bounds = array<i64: 2, 6, 1, 16>}, {pipeline_mode = #tpu.pipeline_mode<synchronous>, transform_indices = @transform_8, window_bounds = array<i64: 2, 16, 16>}, {pipeline_mode = #tpu.pipeline_mode<synchronous>, transform_indices = @transform_9, window_bounds = array<i64: 2, 1, 16>}, {pipeline_mode = #tpu.pipeline_mode<synchronous>, transform_indices = @transform_10, window_bounds = array<i64: 2, 16, 16>}, {pipeline_mode = #tpu.pipeline_mode<synchronous>, transform_indices = @transform_11, window_bounds = array<i64: 16, 8>}, {pipeline_mode = #tpu.pipeline_mode<synchronous>, transform_indices = @transform_12, window_bounds = array<i64: 1, 8>}, {transform_indices = @transform_13, window_bounds = array<i64: 16, 8>}]} {
    %c0 = arith.constant 0 : index
    %c0_0 = arith.constant 0 : index
    %0 = vector.load %arg1[%c0, %c0_0] : memref<16x4xf32, #tpu.memory_space<vmem>>, vector<16x4xf32>
    %c0_1 = arith.constant 0 : index
    %c0_2 = arith.constant 0 : index
    %1 = vector.load %arg3[%c0_1, %c0_2] : memref<4x16xf32, #tpu.memory_space<vmem>>, vector<4x16xf32>
    %cst = arith.constant dense<0.000000e+00> : vector<16x16xf32>
    %2 = tpu.matmul %0, %1, %cst {dimension_numbers = #tpu.dot_dimension_numbers<[1], [0], [0], [1], [0, 0, 1, 1], [], []>} : vector<16x4xf32>, vector<4x16xf32>, vector<16x16xf32> -> vector<16x16xf32>
    %c0_3 = arith.constant 0 : index
    %c0_4 = arith.constant 0 : index
    %3 = vector.load %arg4[%c0_3, %c0_4] : memref<1x16xf32, #tpu.memory_space<vmem>>, vector<1x16xf32>
    %4 = vector.broadcast %3 : vector<1x16xf32> to vector<16x16xf32>
    %5 = arith.addf %2, %4 : vector<16x16xf32>
    %c0_5 = arith.constant 0 : index
    %c0_6 = arith.constant 0 : index
    %6 = vector.load %arg2[%c0_5, %c0_6] : memref<16x16xf32, #tpu.memory_space<vmem>>, vector<16x16xf32>
    %7 = arith.addf %5, %6 : vector<16x16xf32>
    %c0_7 = arith.constant 0 : index
    %c0_8 = arith.constant 0 : index
    %c0_9 = arith.constant 0 : index
    %c0_10 = arith.constant 0 : index
    %c0_11 = arith.constant 0 : index
    %8 = vector.load %arg5[%c0_7, %c0_8, %c0_9, %c0_10, %c0_11] : memref<2x3x2x16x8xf32, #tpu.memory_space<vmem>>, vector<1x1x1x16x8xf32>
    %9 = vector.shape_cast %8 : vector<1x1x1x16x8xf32> to vector<16x8xf32>
    %cst_12 = arith.constant dense<0.000000e+00> : vector<16x8xf32>
    %10 = tpu.matmul %7, %9, %cst_12 {dimension_numbers = #tpu.dot_dimension_numbers<[1], [0], [0], [1], [0, 0, 1, 1], [], []>} : vector<16x16xf32>, vector<16x8xf32>, vector<16x8xf32> -> vector<16x8xf32>
    %c0_13 = arith.constant 0 : index
    %c0_14 = arith.constant 0 : index
    %c0_15 = arith.constant 0 : index
    %c0_16 = arith.constant 0 : index
    %c0_17 = arith.constant 0 : index
    %11 = vector.load %arg6[%c0_13, %c0_14, %c0_15, %c0_16, %c0_17] : memref<2x3x2x1x8xf32, #tpu.memory_space<vmem>>, vector<1x1x1x1x8xf32>
    %12 = vector.shape_cast %11 : vector<1x1x1x1x8xf32> to vector<1x8xf32>
    %13 = vector.broadcast %12 : vector<1x8xf32> to vector<16x8xf32>
    %14 = arith.addf %10, %13 : vector<16x8xf32>
    %c0_18 = arith.constant 0 : index
    %c1 = arith.constant 1 : index
    %c0_19 = arith.constant 0 : index
    %c0_20 = arith.constant 0 : index
    %c0_21 = arith.constant 0 : index
    %15 = vector.load %arg5[%c0_18, %c1, %c0_19, %c0_20, %c0_21] : memref<2x3x2x16x8xf32, #tpu.memory_space<vmem>>, vector<1x1x1x16x8xf32>
    %16 = vector.shape_cast %15 : vector<1x1x1x16x8xf32> to vector<16x8xf32>
    %cst_22 = arith.constant dense<0.000000e+00> : vector<16x8xf32>
    %17 = tpu.matmul %7, %16, %cst_22 {dimension_numbers = #tpu.dot_dimension_numbers<[1], [0], [0], [1], [0, 0, 1, 1], [], []>} : vector<16x16xf32>, vector<16x8xf32>, vector<16x8xf32> -> vector<16x8xf32>
    %c0_23 = arith.constant 0 : index
    %c1_24 = arith.constant 1 : index
    %c0_25 = arith.constant 0 : index
    %c0_26 = arith.constant 0 : index
    %c0_27 = arith.constant 0 : index
    %18 = vector.load %arg6[%c0_23, %c1_24, %c0_25, %c0_26, %c0_27] : memref<2x3x2x1x8xf32, #tpu.memory_space<vmem>>, vector<1x1x1x1x8xf32>
    %19 = vector.shape_cast %18 : vector<1x1x1x1x8xf32> to vector<1x8xf32>
    %20 = vector.broadcast %19 : vector<1x8xf32> to vector<16x8xf32>
    %21 = arith.addf %17, %20 : vector<16x8xf32>
    %c0_28 = arith.constant 0 : index
    %c2 = arith.constant 2 : index
    %c0_29 = arith.constant 0 : index
    %c0_30 = arith.constant 0 : index
    %c0_31 = arith.constant 0 : index
    %22 = vector.load %arg5[%c0_28, %c2, %c0_29, %c0_30, %c0_31] : memref<2x3x2x16x8xf32, #tpu.memory_space<vmem>>, vector<1x1x1x16x8xf32>
    %23 = vector.shape_cast %22 : vector<1x1x1x16x8xf32> to vector<16x8xf32>
    %cst_32 = arith.constant dense<0.000000e+00> : vector<16x8xf32>
    %24 = tpu.matmul %7, %23, %cst_32 {dimension_numbers = #tpu.dot_dimension_numbers<[1], [0], [0], [1], [0, 0, 1, 1], [], []>} : vector<16x16xf32>, vector<16x8xf32>, vector<16x8xf32> -> vector<16x8xf32>
    %c0_33 = arith.constant 0 : index
    %c2_34 = arith.constant 2 : index
    %c0_35 = arith.constant 0 : index
    %c0_36 = arith.constant 0 : index
    %c0_37 = arith.constant 0 : index
    %25 = vector.load %arg6[%c0_33, %c2_34, %c0_35, %c0_36, %c0_37] : memref<2x3x2x1x8xf32, #tpu.memory_space<vmem>>, vector<1x1x1x1x8xf32>
    %26 = vector.shape_cast %25 : vector<1x1x1x1x8xf32> to vector<1x8xf32>
    %27 = vector.broadcast %26 : vector<1x8xf32> to vector<16x8xf32>
    %28 = arith.addf %24, %27 : vector<16x8xf32>
    %29 = vector.shape_cast %14 : vector<16x8xf32> to vector<2x8x8xf32>
    %30 = vector.shape_cast %21 : vector<16x8xf32> to vector<2x8x8xf32>
    %31 = vector.shape_cast %28 : vector<16x8xf32> to vector<2x8x8xf32>
    "tpu.trace_start"() <{level = 10 : i32, message = "bqd,bkd->bqk"}> : () -> ()
    %cst_38 = arith.constant dense<0.000000e+00> : vector<2x8x8xf32>
    %32 = tpu.matmul %29, %30, %cst_38 {dimension_numbers = #tpu.dot_dimension_numbers<[2], [2], [1], [1], [0, 0, 0, 1, 1, 1], [0], [0]>} : vector<2x8x8xf32>, vector<2x8x8xf32>, vector<2x8x8xf32> -> vector<2x8x8xf32>
    "tpu.trace_stop"() : () -> ()
    %cst_39 = arith.constant dense<0xFF800000> : vector<2x8xf32>
    %33 = vector.multi_reduction <maximumf>, %32, %cst_39 [2] : vector<2x8x8xf32> to vector<2x8xf32>
    %34 = vector.shape_cast %33 : vector<2x8xf32> to vector<2x8x1xf32>
    %35 = vector.broadcast %34 : vector<2x8x1xf32> to vector<2x8x8xf32>
    %36 = arith.subf %32, %35 : vector<2x8x8xf32>
    %37 = math.exp %36 : vector<2x8x8xf32>
    %cst_40 = arith.constant dense<0.000000e+00> : vector<2x8xf32>
    %38 = vector.multi_reduction <add>, %37, %cst_40 [2] : vector<2x8x8xf32> to vector<2x8xf32>
    %39 = vector.shape_cast %38 : vector<2x8xf32> to vector<2x8x1xf32>
    %40 = tpu.reciprocal %39 {approx = true} : vector<2x8x1xf32> -> vector<2x8x1xf32>
    %41 = vector.broadcast %40 : vector<2x8x1xf32> to vector<2x8x8xf32>
    %42 = arith.mulf %37, %41 : vector<2x8x8xf32>
    "tpu.trace_start"() <{level = 10 : i32, message = "bqk,bkd->bqd"}> : () -> ()
    %cst_41 = arith.constant dense<0.000000e+00> : vector<2x8x8xf32>
    %43 = tpu.matmul %42, %31, %cst_41 {dimension_numbers = #tpu.dot_dimension_numbers<[2], [1], [1], [2], [0, 0, 0, 1, 1, 2], [0], [0]>} : vector<2x8x8xf32>, vector<2x8x8xf32>, vector<2x8x8xf32> -> vector<2x8x8xf32>
    "tpu.trace_stop"() : () -> ()
    %44 = vector.shape_cast %43 : vector<2x8x8xf32> to vector<16x8xf32>
    %c0_42 = arith.constant 0 : index
    %c0_43 = arith.constant 0 : index
    %c0_44 = arith.constant 0 : index
    %c0_45 = arith.constant 0 : index
    %45 = vector.load %arg7[%c0_42, %c0_43, %c0_44, %c0_45] : memref<2x2x8x16xf32, #tpu.memory_space<vmem>>, vector<1x1x8x16xf32>
    %46 = vector.shape_cast %45 : vector<1x1x8x16xf32> to vector<8x16xf32>
    %cst_46 = arith.constant dense<0.000000e+00> : vector<16x16xf32>
    %47 = tpu.matmul %44, %46, %cst_46 {dimension_numbers = #tpu.dot_dimension_numbers<[1], [0], [0], [1], [0, 0, 1, 1], [], []>} : vector<16x8xf32>, vector<8x16xf32>, vector<16x16xf32> -> vector<16x16xf32>
    %c0_47 = arith.constant 0 : index
    %c0_48 = arith.constant 0 : index
    %c1_49 = arith.constant 1 : index
    %c0_50 = arith.constant 0 : index
    %c0_51 = arith.constant 0 : index
    %48 = vector.load %arg5[%c0_47, %c0_48, %c1_49, %c0_50, %c0_51] : memref<2x3x2x16x8xf32, #tpu.memory_space<vmem>>, vector<1x1x1x16x8xf32>
    %49 = vector.shape_cast %48 : vector<1x1x1x16x8xf32> to vector<16x8xf32>
    %cst_52 = arith.constant dense<0.000000e+00> : vector<16x8xf32>
    %50 = tpu.matmul %7, %49, %cst_52 {dimension_numbers = #tpu.dot_dimension_numbers<[1], [0], [0], [1], [0, 0, 1, 1], [], []>} : vector<16x16xf32>, vector<16x8xf32>, vector<16x8xf32> -> vector<16x8xf32>
    %c0_53 = arith.constant 0 : index
    %c0_54 = arith.constant 0 : index
    %c1_55 = arith.constant 1 : index
    %c0_56 = arith.constant 0 : index
    %c0_57 = arith.constant 0 : index
    %51 = vector.load %arg6[%c0_53, %c0_54, %c1_55, %c0_56, %c0_57] : memref<2x3x2x1x8xf32, #tpu.memory_space<vmem>>, vector<1x1x1x1x8xf32>
    %52 = vector.shape_cast %51 : vector<1x1x1x1x8xf32> to vector<1x8xf32>
    %53 = vector.broadcast %52 : vector<1x8xf32> to vector<16x8xf32>
    %54 = arith.addf %50, %53 : vector<16x8xf32>
    %c0_58 = arith.constant 0 : index
    %c1_59 = arith.constant 1 : index
    %c1_60 = arith.constant 1 : index
    %c0_61 = arith.constant 0 : index
    %c0_62 = arith.constant 0 : index
    %55 = vector.load %arg5[%c0_58, %c1_59, %c1_60, %c0_61, %c0_62] : memref<2x3x2x16x8xf32, #tpu.memory_space<vmem>>, vector<1x1x1x16x8xf32>
    %56 = vector.shape_cast %55 : vector<1x1x1x16x8xf32> to vector<16x8xf32>
    %cst_63 = arith.constant dense<0.000000e+00> : vector<16x8xf32>
    %57 = tpu.matmul %7, %56, %cst_63 {dimension_numbers = #tpu.dot_dimension_numbers<[1], [0], [0], [1], [0, 0, 1, 1], [], []>} : vector<16x16xf32>, vector<16x8xf32>, vector<16x8xf32> -> vector<16x8xf32>
    %c0_64 = arith.constant 0 : index
    %c1_65 = arith.constant 1 : index
    %c1_66 = arith.constant 1 : index
    %c0_67 = arith.constant 0 : index
    %c0_68 = arith.constant 0 : index
    %58 = vector.load %arg6[%c0_64, %c1_65, %c1_66, %c0_67, %c0_68] : memref<2x3x2x1x8xf32, #tpu.memory_space<vmem>>, vector<1x1x1x1x8xf32>
    %59 = vector.shape_cast %58 : vector<1x1x1x1x8xf32> to vector<1x8xf32>
    %60 = vector.broadcast %59 : vector<1x8xf32> to vector<16x8xf32>
    %61 = arith.addf %57, %60 : vector<16x8xf32>
    %c0_69 = arith.constant 0 : index
    %c2_70 = arith.constant 2 : index
    %c1_71 = arith.constant 1 : index
    %c0_72 = arith.constant 0 : index
    %c0_73 = arith.constant 0 : index
    %62 = vector.load %arg5[%c0_69, %c2_70, %c1_71, %c0_72, %c0_73] : memref<2x3x2x16x8xf32, #tpu.memory_space<vmem>>, vector<1x1x1x16x8xf32>
    %63 = vector.shape_cast %62 : vector<1x1x1x16x8xf32> to vector<16x8xf32>
    %cst_74 = arith.constant dense<0.000000e+00> : vector<16x8xf32>
    %64 = tpu.matmul %7, %63, %cst_74 {dimension_numbers = #tpu.dot_dimension_numbers<[1], [0], [0], [1], [0, 0, 1, 1], [], []>} : vector<16x16xf32>, vector<16x8xf32>, vector<16x8xf32> -> vector<16x8xf32>
    %c0_75 = arith.constant 0 : index
    %c2_76 = arith.constant 2 : index
    %c1_77 = arith.constant 1 : index
    %c0_78 = arith.constant 0 : index
    %c0_79 = arith.constant 0 : index
    %65 = vector.load %arg6[%c0_75, %c2_76, %c1_77, %c0_78, %c0_79] : memref<2x3x2x1x8xf32, #tpu.memory_space<vmem>>, vector<1x1x1x1x8xf32>
    %66 = vector.shape_cast %65 : vector<1x1x1x1x8xf32> to vector<1x8xf32>
    %67 = vector.broadcast %66 : vector<1x8xf32> to vector<16x8xf32>
    %68 = arith.addf %64, %67 : vector<16x8xf32>
    %69 = vector.shape_cast %54 : vector<16x8xf32> to vector<2x8x8xf32>
    %70 = vector.shape_cast %61 : vector<16x8xf32> to vector<2x8x8xf32>
    %71 = vector.shape_cast %68 : vector<16x8xf32> to vector<2x8x8xf32>
    "tpu.trace_start"() <{level = 10 : i32, message = "bqd,bkd->bqk"}> : () -> ()
    %cst_80 = arith.constant dense<0.000000e+00> : vector<2x8x8xf32>
    %72 = tpu.matmul %69, %70, %cst_80 {dimension_numbers = #tpu.dot_dimension_numbers<[2], [2], [1], [1], [0, 0, 0, 1, 1, 1], [0], [0]>} : vector<2x8x8xf32>, vector<2x8x8xf32>, vector<2x8x8xf32> -> vector<2x8x8xf32>
    "tpu.trace_stop"() : () -> ()
    %cst_81 = arith.constant dense<0xFF800000> : vector<2x8xf32>
    %73 = vector.multi_reduction <maximumf>, %72, %cst_81 [2] : vector<2x8x8xf32> to vector<2x8xf32>
    %74 = vector.shape_cast %73 : vector<2x8xf32> to vector<2x8x1xf32>
    %75 = vector.broadcast %74 : vector<2x8x1xf32> to vector<2x8x8xf32>
    %76 = arith.subf %72, %75 : vector<2x8x8xf32>
    %77 = math.exp %76 : vector<2x8x8xf32>
    %cst_82 = arith.constant dense<0.000000e+00> : vector<2x8xf32>
    %78 = vector.multi_reduction <add>, %77, %cst_82 [2] : vector<2x8x8xf32> to vector<2x8xf32>
    %79 = vector.shape_cast %78 : vector<2x8xf32> to vector<2x8x1xf32>
    %80 = tpu.reciprocal %79 {approx = true} : vector<2x8x1xf32> -> vector<2x8x1xf32>
    %81 = vector.broadcast %80 : vector<2x8x1xf32> to vector<2x8x8xf32>
    %82 = arith.mulf %77, %81 : vector<2x8x8xf32>
    "tpu.trace_start"() <{level = 10 : i32, message = "bqk,bkd->bqd"}> : () -> ()
    %cst_83 = arith.constant dense<0.000000e+00> : vector<2x8x8xf32>
    %83 = tpu.matmul %82, %71, %cst_83 {dimension_numbers = #tpu.dot_dimension_numbers<[2], [1], [1], [2], [0, 0, 0, 1, 1, 2], [0], [0]>} : vector<2x8x8xf32>, vector<2x8x8xf32>, vector<2x8x8xf32> -> vector<2x8x8xf32>
    "tpu.trace_stop"() : () -> ()
    %84 = vector.shape_cast %83 : vector<2x8x8xf32> to vector<16x8xf32>
    %c0_84 = arith.constant 0 : index
    %c1_85 = arith.constant 1 : index
    %c0_86 = arith.constant 0 : index
    %c0_87 = arith.constant 0 : index
    %85 = vector.load %arg7[%c0_84, %c1_85, %c0_86, %c0_87] : memref<2x2x8x16xf32, #tpu.memory_space<vmem>>, vector<1x1x8x16xf32>
    %86 = vector.shape_cast %85 : vector<1x1x8x16xf32> to vector<8x16xf32>
    %cst_88 = arith.constant dense<0.000000e+00> : vector<16x16xf32>
    %87 = tpu.matmul %84, %86, %cst_88 {dimension_numbers = #tpu.dot_dimension_numbers<[1], [0], [0], [1], [0, 0, 1, 1], [], []>} : vector<16x8xf32>, vector<8x16xf32>, vector<16x16xf32> -> vector<16x16xf32>
    %88 = arith.addf %47, %87 : vector<16x16xf32>
    %c0_89 = arith.constant 0 : index
    %c0_90 = arith.constant 0 : index
    %c0_91 = arith.constant 0 : index
    %c0_92 = arith.constant 0 : index
    %89 = vector.load %arg8[%c0_89, %c0_90, %c0_91, %c0_92] : memref<2x6x1x16xf32, #tpu.memory_space<vmem>>, vector<1x1x1x16xf32>
    %90 = vector.shape_cast %89 : vector<1x1x1x16xf32> to vector<1x16xf32>
    %91 = vector.broadcast %90 : vector<1x16xf32> to vector<16x16xf32>
    %92 = arith.addf %88, %91 : vector<16x16xf32>
    %93 = arith.addf %7, %92 : vector<16x16xf32>
    %c0_93 = arith.constant 0 : index
    %c1_94 = arith.constant 1 : index
    %c0_95 = arith.constant 0 : index
    %c0_96 = arith.constant 0 : index
    %94 = vector.load %arg8[%c0_93, %c1_94, %c0_95, %c0_96] : memref<2x6x1x16xf32, #tpu.memory_space<vmem>>, vector<1x1x1x16xf32>
    %95 = vector.shape_cast %94 : vector<1x1x1x16xf32> to vector<1x16xf32>
    %c0_97 = arith.constant 0 : index
    %c2_98 = arith.constant 2 : index
    %c0_99 = arith.constant 0 : index
    %c0_100 = arith.constant 0 : index
    %96 = vector.load %arg8[%c0_97, %c2_98, %c0_99, %c0_100] : memref<2x6x1x16xf32, #tpu.memory_space<vmem>>, vector<1x1x1x16xf32>
    %97 = vector.shape_cast %96 : vector<1x1x1x16xf32> to vector<1x16xf32>
    %cst_101 = arith.constant dense<0.000000e+00> : vector<16xf32>
    %98 = vector.multi_reduction <add>, %93, %cst_101 [1] : vector<16x16xf32> to vector<16xf32>
    %99 = vector.shape_cast %98 : vector<16xf32> to vector<16x1xf32>
    %cst_102 = arith.constant 1.600000e+01 : f32
    %100 = vector.broadcast %cst_102 : f32 to vector<16x1xf32>
    %101 = arith.divf %99, %100 : vector<16x1xf32>
    %102 = vector.broadcast %101 : vector<16x1xf32> to vector<16x16xf32>
    %103 = arith.subf %93, %102 : vector<16x16xf32>
    %104 = arith.mulf %103, %103 : vector<16x16xf32>
    %cst_103 = arith.constant dense<0.000000e+00> : vector<16xf32>
    %105 = vector.multi_reduction <add>, %104, %cst_103 [1] : vector<16x16xf32> to vector<16xf32>
    %106 = vector.shape_cast %105 : vector<16xf32> to vector<16x1xf32>
    %cst_104 = arith.constant 1.600000e+01 : f32
    %107 = vector.broadcast %cst_104 : f32 to vector<16x1xf32>
    %108 = arith.divf %106, %107 : vector<16x1xf32>
    %109 = vector.broadcast %101 : vector<16x1xf32> to vector<16x16xf32>
    %110 = arith.subf %93, %109 : vector<16x16xf32>
    %cst_105 = arith.constant 9.99999974E-6 : f32
    %111 = vector.broadcast %cst_105 : f32 to vector<16x1xf32>
    %112 = arith.addf %108, %111 : vector<16x1xf32>
    %113 = math.rsqrt %112 : vector<16x1xf32>
    %114 = vector.broadcast %113 : vector<16x1xf32> to vector<16x16xf32>
    %115 = arith.mulf %110, %114 : vector<16x16xf32>
    %116 = vector.broadcast %95 : vector<1x16xf32> to vector<16x16xf32>
    %117 = arith.mulf %115, %116 : vector<16x16xf32>
    %118 = vector.broadcast %97 : vector<1x16xf32> to vector<16x16xf32>
    %119 = arith.addf %117, %118 : vector<16x16xf32>
    %c0_106 = arith.constant 0 : index
    %c0_107 = arith.constant 0 : index
    %c0_108 = arith.constant 0 : index
    %120 = vector.load %arg9[%c0_106, %c0_107, %c0_108] : memref<2x16x16xf32, #tpu.memory_space<vmem>>, vector<1x16x16xf32>
    %121 = vector.shape_cast %120 : vector<1x16x16xf32> to vector<16x16xf32>
    %cst_109 = arith.constant dense<0.000000e+00> : vector<16x16xf32>
    %122 = tpu.matmul %119, %121, %cst_109 {dimension_numbers = #tpu.dot_dimension_numbers<[1], [0], [0], [1], [0, 0, 1, 1], [], []>} : vector<16x16xf32>, vector<16x16xf32>, vector<16x16xf32> -> vector<16x16xf32>
    %c0_110 = arith.constant 0 : index
    %c0_111 = arith.constant 0 : index
    %c0_112 = arith.constant 0 : index
    %123 = vector.load %arg10[%c0_110, %c0_111, %c0_112] : memref<2x1x16xf32, #tpu.memory_space<vmem>>, vector<1x1x16xf32>
    %124 = vector.shape_cast %123 : vector<1x1x16xf32> to vector<1x16xf32>
    %125 = vector.broadcast %124 : vector<1x16xf32> to vector<16x16xf32>
    %126 = arith.addf %122, %125 : vector<16x16xf32>
    %cst_113 = arith.constant 0.000000e+00 : f32
    %127 = vector.broadcast %cst_113 : f32 to vector<16x16xf32>
    %128 = arith.maximumf %126, %127 : vector<16x16xf32>
    %c0_114 = arith.constant 0 : index
    %c0_115 = arith.constant 0 : index
    %c0_116 = arith.constant 0 : index
    %129 = vector.load %arg11[%c0_114, %c0_115, %c0_116] : memref<2x16x16xf32, #tpu.memory_space<vmem>>, vector<1x16x16xf32>
    %130 = vector.shape_cast %129 : vector<1x16x16xf32> to vector<16x16xf32>
    %cst_117 = arith.constant dense<0.000000e+00> : vector<16x16xf32>
    %131 = tpu.matmul %128, %130, %cst_117 {dimension_numbers = #tpu.dot_dimension_numbers<[1], [0], [0], [1], [0, 0, 1, 1], [], []>} : vector<16x16xf32>, vector<16x16xf32>, vector<16x16xf32> -> vector<16x16xf32>
    %c0_118 = arith.constant 0 : index
    %c5 = arith.constant 5 : index
    %c0_119 = arith.constant 0 : index
    %c0_120 = arith.constant 0 : index
    %132 = vector.load %arg8[%c0_118, %c5, %c0_119, %c0_120] : memref<2x6x1x16xf32, #tpu.memory_space<vmem>>, vector<1x1x1x16xf32>
    %133 = vector.shape_cast %132 : vector<1x1x1x16xf32> to vector<1x16xf32>
    %134 = vector.broadcast %133 : vector<1x16xf32> to vector<16x16xf32>
    %135 = arith.addf %131, %134 : vector<16x16xf32>
    %136 = arith.addf %119, %135 : vector<16x16xf32>
    %c0_121 = arith.constant 0 : index
    %c3 = arith.constant 3 : index
    %c0_122 = arith.constant 0 : index
    %c0_123 = arith.constant 0 : index
    %137 = vector.load %arg8[%c0_121, %c3, %c0_122, %c0_123] : memref<2x6x1x16xf32, #tpu.memory_space<vmem>>, vector<1x1x1x16xf32>
    %138 = vector.shape_cast %137 : vector<1x1x1x16xf32> to vector<1x16xf32>
    %c0_124 = arith.constant 0 : index
    %c4 = arith.constant 4 : index
    %c0_125 = arith.constant 0 : index
    %c0_126 = arith.constant 0 : index
    %139 = vector.load %arg8[%c0_124, %c4, %c0_125, %c0_126] : memref<2x6x1x16xf32, #tpu.memory_space<vmem>>, vector<1x1x1x16xf32>
    %140 = vector.shape_cast %139 : vector<1x1x1x16xf32> to vector<1x16xf32>
    %cst_127 = arith.constant dense<0.000000e+00> : vector<16xf32>
    %141 = vector.multi_reduction <add>, %136, %cst_127 [1] : vector<16x16xf32> to vector<16xf32>
    %142 = vector.shape_cast %141 : vector<16xf32> to vector<16x1xf32>
    %cst_128 = arith.constant 1.600000e+01 : f32
    %143 = vector.broadcast %cst_128 : f32 to vector<16x1xf32>
    %144 = arith.divf %142, %143 : vector<16x1xf32>
    %145 = vector.broadcast %144 : vector<16x1xf32> to vector<16x16xf32>
    %146 = arith.subf %136, %145 : vector<16x16xf32>
    %147 = arith.mulf %146, %146 : vector<16x16xf32>
    %cst_129 = arith.constant dense<0.000000e+00> : vector<16xf32>
    %148 = vector.multi_reduction <add>, %147, %cst_129 [1] : vector<16x16xf32> to vector<16xf32>
    %149 = vector.shape_cast %148 : vector<16xf32> to vector<16x1xf32>
    %cst_130 = arith.constant 1.600000e+01 : f32
    %150 = vector.broadcast %cst_130 : f32 to vector<16x1xf32>
    %151 = arith.divf %149, %150 : vector<16x1xf32>
    %152 = vector.broadcast %144 : vector<16x1xf32> to vector<16x16xf32>
    %153 = arith.subf %136, %152 : vector<16x16xf32>
    %cst_131 = arith.constant 9.99999974E-6 : f32
    %154 = vector.broadcast %cst_131 : f32 to vector<16x1xf32>
    %155 = arith.addf %151, %154 : vector<16x1xf32>
    %156 = math.rsqrt %155 : vector<16x1xf32>
    %157 = vector.broadcast %156 : vector<16x1xf32> to vector<16x16xf32>
    %158 = arith.mulf %153, %157 : vector<16x16xf32>
    %159 = vector.broadcast %138 : vector<1x16xf32> to vector<16x16xf32>
    %160 = arith.mulf %158, %159 : vector<16x16xf32>
    %161 = vector.broadcast %140 : vector<1x16xf32> to vector<16x16xf32>
    %162 = arith.addf %160, %161 : vector<16x16xf32>
    %c1_132 = arith.constant 1 : index
    %c0_133 = arith.constant 0 : index
    %c0_134 = arith.constant 0 : index
    %c0_135 = arith.constant 0 : index
    %c0_136 = arith.constant 0 : index
    %163 = vector.load %arg5[%c1_132, %c0_133, %c0_134, %c0_135, %c0_136] : memref<2x3x2x16x8xf32, #tpu.memory_space<vmem>>, vector<1x1x1x16x8xf32>
    %164 = vector.shape_cast %163 : vector<1x1x1x16x8xf32> to vector<16x8xf32>
    %cst_137 = arith.constant dense<0.000000e+00> : vector<16x8xf32>
    %165 = tpu.matmul %162, %164, %cst_137 {dimension_numbers = #tpu.dot_dimension_numbers<[1], [0], [0], [1], [0, 0, 1, 1], [], []>} : vector<16x16xf32>, vector<16x8xf32>, vector<16x8xf32> -> vector<16x8xf32>
    %c1_138 = arith.constant 1 : index
    %c0_139 = arith.constant 0 : index
    %c0_140 = arith.constant 0 : index
    %c0_141 = arith.constant 0 : index
    %c0_142 = arith.constant 0 : index
    %166 = vector.load %arg6[%c1_138, %c0_139, %c0_140, %c0_141, %c0_142] : memref<2x3x2x1x8xf32, #tpu.memory_space<vmem>>, vector<1x1x1x1x8xf32>
    %167 = vector.shape_cast %166 : vector<1x1x1x1x8xf32> to vector<1x8xf32>
    %168 = vector.broadcast %167 : vector<1x8xf32> to vector<16x8xf32>
    %169 = arith.addf %165, %168 : vector<16x8xf32>
    %c1_143 = arith.constant 1 : index
    %c1_144 = arith.constant 1 : index
    %c0_145 = arith.constant 0 : index
    %c0_146 = arith.constant 0 : index
    %c0_147 = arith.constant 0 : index
    %170 = vector.load %arg5[%c1_143, %c1_144, %c0_145, %c0_146, %c0_147] : memref<2x3x2x16x8xf32, #tpu.memory_space<vmem>>, vector<1x1x1x16x8xf32>
    %171 = vector.shape_cast %170 : vector<1x1x1x16x8xf32> to vector<16x8xf32>
    %cst_148 = arith.constant dense<0.000000e+00> : vector<16x8xf32>
    %172 = tpu.matmul %162, %171, %cst_148 {dimension_numbers = #tpu.dot_dimension_numbers<[1], [0], [0], [1], [0, 0, 1, 1], [], []>} : vector<16x16xf32>, vector<16x8xf32>, vector<16x8xf32> -> vector<16x8xf32>
    %c1_149 = arith.constant 1 : index
    %c1_150 = arith.constant 1 : index
    %c0_151 = arith.constant 0 : index
    %c0_152 = arith.constant 0 : index
    %c0_153 = arith.constant 0 : index
    %173 = vector.load %arg6[%c1_149, %c1_150, %c0_151, %c0_152, %c0_153] : memref<2x3x2x1x8xf32, #tpu.memory_space<vmem>>, vector<1x1x1x1x8xf32>
    %174 = vector.shape_cast %173 : vector<1x1x1x1x8xf32> to vector<1x8xf32>
    %175 = vector.broadcast %174 : vector<1x8xf32> to vector<16x8xf32>
    %176 = arith.addf %172, %175 : vector<16x8xf32>
    %c1_154 = arith.constant 1 : index
    %c2_155 = arith.constant 2 : index
    %c0_156 = arith.constant 0 : index
    %c0_157 = arith.constant 0 : index
    %c0_158 = arith.constant 0 : index
    %177 = vector.load %arg5[%c1_154, %c2_155, %c0_156, %c0_157, %c0_158] : memref<2x3x2x16x8xf32, #tpu.memory_space<vmem>>, vector<1x1x1x16x8xf32>
    %178 = vector.shape_cast %177 : vector<1x1x1x16x8xf32> to vector<16x8xf32>
    %cst_159 = arith.constant dense<0.000000e+00> : vector<16x8xf32>
    %179 = tpu.matmul %162, %178, %cst_159 {dimension_numbers = #tpu.dot_dimension_numbers<[1], [0], [0], [1], [0, 0, 1, 1], [], []>} : vector<16x16xf32>, vector<16x8xf32>, vector<16x8xf32> -> vector<16x8xf32>
    %c1_160 = arith.constant 1 : index
    %c2_161 = arith.constant 2 : index
    %c0_162 = arith.constant 0 : index
    %c0_163 = arith.constant 0 : index
    %c0_164 = arith.constant 0 : index
    %180 = vector.load %arg6[%c1_160, %c2_161, %c0_162, %c0_163, %c0_164] : memref<2x3x2x1x8xf32, #tpu.memory_space<vmem>>, vector<1x1x1x1x8xf32>
    %181 = vector.shape_cast %180 : vector<1x1x1x1x8xf32> to vector<1x8xf32>
    %182 = vector.broadcast %181 : vector<1x8xf32> to vector<16x8xf32>
    %183 = arith.addf %179, %182 : vector<16x8xf32>
    %184 = vector.shape_cast %169 : vector<16x8xf32> to vector<2x8x8xf32>
    %185 = vector.shape_cast %176 : vector<16x8xf32> to vector<2x8x8xf32>
    %186 = vector.shape_cast %183 : vector<16x8xf32> to vector<2x8x8xf32>
    "tpu.trace_start"() <{level = 10 : i32, message = "bqd,bkd->bqk"}> : () -> ()
    %cst_165 = arith.constant dense<0.000000e+00> : vector<2x8x8xf32>
    %187 = tpu.matmul %184, %185, %cst_165 {dimension_numbers = #tpu.dot_dimension_numbers<[2], [2], [1], [1], [0, 0, 0, 1, 1, 1], [0], [0]>} : vector<2x8x8xf32>, vector<2x8x8xf32>, vector<2x8x8xf32> -> vector<2x8x8xf32>
    "tpu.trace_stop"() : () -> ()
    %cst_166 = arith.constant dense<0xFF800000> : vector<2x8xf32>
    %188 = vector.multi_reduction <maximumf>, %187, %cst_166 [2] : vector<2x8x8xf32> to vector<2x8xf32>
    %189 = vector.shape_cast %188 : vector<2x8xf32> to vector<2x8x1xf32>
    %190 = vector.broadcast %189 : vector<2x8x1xf32> to vector<2x8x8xf32>
    %191 = arith.subf %187, %190 : vector<2x8x8xf32>
    %192 = math.exp %191 : vector<2x8x8xf32>
    %cst_167 = arith.constant dense<0.000000e+00> : vector<2x8xf32>
    %193 = vector.multi_reduction <add>, %192, %cst_167 [2] : vector<2x8x8xf32> to vector<2x8xf32>
    %194 = vector.shape_cast %193 : vector<2x8xf32> to vector<2x8x1xf32>
    %195 = tpu.reciprocal %194 {approx = true} : vector<2x8x1xf32> -> vector<2x8x1xf32>
    %196 = vector.broadcast %195 : vector<2x8x1xf32> to vector<2x8x8xf32>
    %197 = arith.mulf %192, %196 : vector<2x8x8xf32>
    "tpu.trace_start"() <{level = 10 : i32, message = "bqk,bkd->bqd"}> : () -> ()
    %cst_168 = arith.constant dense<0.000000e+00> : vector<2x8x8xf32>
    %198 = tpu.matmul %197, %186, %cst_168 {dimension_numbers = #tpu.dot_dimension_numbers<[2], [1], [1], [2], [0, 0, 0, 1, 1, 2], [0], [0]>} : vector<2x8x8xf32>, vector<2x8x8xf32>, vector<2x8x8xf32> -> vector<2x8x8xf32>
    "tpu.trace_stop"() : () -> ()
    %199 = vector.shape_cast %198 : vector<2x8x8xf32> to vector<16x8xf32>
    %c1_169 = arith.constant 1 : index
    %c0_170 = arith.constant 0 : index
    %c0_171 = arith.constant 0 : index
    %c0_172 = arith.constant 0 : index
    %200 = vector.load %arg7[%c1_169, %c0_170, %c0_171, %c0_172] : memref<2x2x8x16xf32, #tpu.memory_space<vmem>>, vector<1x1x8x16xf32>
    %201 = vector.shape_cast %200 : vector<1x1x8x16xf32> to vector<8x16xf32>
    %cst_173 = arith.constant dense<0.000000e+00> : vector<16x16xf32>
    %202 = tpu.matmul %199, %201, %cst_173 {dimension_numbers = #tpu.dot_dimension_numbers<[1], [0], [0], [1], [0, 0, 1, 1], [], []>} : vector<16x8xf32>, vector<8x16xf32>, vector<16x16xf32> -> vector<16x16xf32>
    %c1_174 = arith.constant 1 : index
    %c0_175 = arith.constant 0 : index
    %c1_176 = arith.constant 1 : index
    %c0_177 = arith.constant 0 : index
    %c0_178 = arith.constant 0 : index
    %203 = vector.load %arg5[%c1_174, %c0_175, %c1_176, %c0_177, %c0_178] : memref<2x3x2x16x8xf32, #tpu.memory_space<vmem>>, vector<1x1x1x16x8xf32>
    %204 = vector.shape_cast %203 : vector<1x1x1x16x8xf32> to vector<16x8xf32>
    %cst_179 = arith.constant dense<0.000000e+00> : vector<16x8xf32>
    %205 = tpu.matmul %162, %204, %cst_179 {dimension_numbers = #tpu.dot_dimension_numbers<[1], [0], [0], [1], [0, 0, 1, 1], [], []>} : vector<16x16xf32>, vector<16x8xf32>, vector<16x8xf32> -> vector<16x8xf32>
    %c1_180 = arith.constant 1 : index
    %c0_181 = arith.constant 0 : index
    %c1_182 = arith.constant 1 : index
    %c0_183 = arith.constant 0 : index
    %c0_184 = arith.constant 0 : index
    %206 = vector.load %arg6[%c1_180, %c0_181, %c1_182, %c0_183, %c0_184] : memref<2x3x2x1x8xf32, #tpu.memory_space<vmem>>, vector<1x1x1x1x8xf32>
    %207 = vector.shape_cast %206 : vector<1x1x1x1x8xf32> to vector<1x8xf32>
    %208 = vector.broadcast %207 : vector<1x8xf32> to vector<16x8xf32>
    %209 = arith.addf %205, %208 : vector<16x8xf32>
    %c1_185 = arith.constant 1 : index
    %c1_186 = arith.constant 1 : index
    %c1_187 = arith.constant 1 : index
    %c0_188 = arith.constant 0 : index
    %c0_189 = arith.constant 0 : index
    %210 = vector.load %arg5[%c1_185, %c1_186, %c1_187, %c0_188, %c0_189] : memref<2x3x2x16x8xf32, #tpu.memory_space<vmem>>, vector<1x1x1x16x8xf32>
    %211 = vector.shape_cast %210 : vector<1x1x1x16x8xf32> to vector<16x8xf32>
    %cst_190 = arith.constant dense<0.000000e+00> : vector<16x8xf32>
    %212 = tpu.matmul %162, %211, %cst_190 {dimension_numbers = #tpu.dot_dimension_numbers<[1], [0], [0], [1], [0, 0, 1, 1], [], []>} : vector<16x16xf32>, vector<16x8xf32>, vector<16x8xf32> -> vector<16x8xf32>
    %c1_191 = arith.constant 1 : index
    %c1_192 = arith.constant 1 : index
    %c1_193 = arith.constant 1 : index
    %c0_194 = arith.constant 0 : index
    %c0_195 = arith.constant 0 : index
    %213 = vector.load %arg6[%c1_191, %c1_192, %c1_193, %c0_194, %c0_195] : memref<2x3x2x1x8xf32, #tpu.memory_space<vmem>>, vector<1x1x1x1x8xf32>
    %214 = vector.shape_cast %213 : vector<1x1x1x1x8xf32> to vector<1x8xf32>
    %215 = vector.broadcast %214 : vector<1x8xf32> to vector<16x8xf32>
    %216 = arith.addf %212, %215 : vector<16x8xf32>
    %c1_196 = arith.constant 1 : index
    %c2_197 = arith.constant 2 : index
    %c1_198 = arith.constant 1 : index
    %c0_199 = arith.constant 0 : index
    %c0_200 = arith.constant 0 : index
    %217 = vector.load %arg5[%c1_196, %c2_197, %c1_198, %c0_199, %c0_200] : memref<2x3x2x16x8xf32, #tpu.memory_space<vmem>>, vector<1x1x1x16x8xf32>
    %218 = vector.shape_cast %217 : vector<1x1x1x16x8xf32> to vector<16x8xf32>
    %cst_201 = arith.constant dense<0.000000e+00> : vector<16x8xf32>
    %219 = tpu.matmul %162, %218, %cst_201 {dimension_numbers = #tpu.dot_dimension_numbers<[1], [0], [0], [1], [0, 0, 1, 1], [], []>} : vector<16x16xf32>, vector<16x8xf32>, vector<16x8xf32> -> vector<16x8xf32>
    %c1_202 = arith.constant 1 : index
    %c2_203 = arith.constant 2 : index
    %c1_204 = arith.constant 1 : index
    %c0_205 = arith.constant 0 : index
    %c0_206 = arith.constant 0 : index
    %220 = vector.load %arg6[%c1_202, %c2_203, %c1_204, %c0_205, %c0_206] : memref<2x3x2x1x8xf32, #tpu.memory_space<vmem>>, vector<1x1x1x1x8xf32>
    %221 = vector.shape_cast %220 : vector<1x1x1x1x8xf32> to vector<1x8xf32>
    %222 = vector.broadcast %221 : vector<1x8xf32> to vector<16x8xf32>
    %223 = arith.addf %219, %222 : vector<16x8xf32>
    %224 = vector.shape_cast %209 : vector<16x8xf32> to vector<2x8x8xf32>
    %225 = vector.shape_cast %216 : vector<16x8xf32> to vector<2x8x8xf32>
    %226 = vector.shape_cast %223 : vector<16x8xf32> to vector<2x8x8xf32>
    "tpu.trace_start"() <{level = 10 : i32, message = "bqd,bkd->bqk"}> : () -> ()
    %cst_207 = arith.constant dense<0.000000e+00> : vector<2x8x8xf32>
    %227 = tpu.matmul %224, %225, %cst_207 {dimension_numbers = #tpu.dot_dimension_numbers<[2], [2], [1], [1], [0, 0, 0, 1, 1, 1], [0], [0]>} : vector<2x8x8xf32>, vector<2x8x8xf32>, vector<2x8x8xf32> -> vector<2x8x8xf32>
    "tpu.trace_stop"() : () -> ()
    %cst_208 = arith.constant dense<0xFF800000> : vector<2x8xf32>
    %228 = vector.multi_reduction <maximumf>, %227, %cst_208 [2] : vector<2x8x8xf32> to vector<2x8xf32>
    %229 = vector.shape_cast %228 : vector<2x8xf32> to vector<2x8x1xf32>
    %230 = vector.broadcast %229 : vector<2x8x1xf32> to vector<2x8x8xf32>
    %231 = arith.subf %227, %230 : vector<2x8x8xf32>
    %232 = math.exp %231 : vector<2x8x8xf32>
    %cst_209 = arith.constant dense<0.000000e+00> : vector<2x8xf32>
    %233 = vector.multi_reduction <add>, %232, %cst_209 [2] : vector<2x8x8xf32> to vector<2x8xf32>
    %234 = vector.shape_cast %233 : vector<2x8xf32> to vector<2x8x1xf32>
    %235 = tpu.reciprocal %234 {approx = true} : vector<2x8x1xf32> -> vector<2x8x1xf32>
    %236 = vector.broadcast %235 : vector<2x8x1xf32> to vector<2x8x8xf32>
    %237 = arith.mulf %232, %236 : vector<2x8x8xf32>
    "tpu.trace_start"() <{level = 10 : i32, message = "bqk,bkd->bqd"}> : () -> ()
    %cst_210 = arith.constant dense<0.000000e+00> : vector<2x8x8xf32>
    %238 = tpu.matmul %237, %226, %cst_210 {dimension_numbers = #tpu.dot_dimension_numbers<[2], [1], [1], [2], [0, 0, 0, 1, 1, 2], [0], [0]>} : vector<2x8x8xf32>, vector<2x8x8xf32>, vector<2x8x8xf32> -> vector<2x8x8xf32>
    "tpu.trace_stop"() : () -> ()
    %239 = vector.shape_cast %238 : vector<2x8x8xf32> to vector<16x8xf32>
    %c1_211 = arith.constant 1 : index
    %c1_212 = arith.constant 1 : index
    %c0_213 = arith.constant 0 : index
    %c0_214 = arith.constant 0 : index
    %240 = vector.load %arg7[%c1_211, %c1_212, %c0_213, %c0_214] : memref<2x2x8x16xf32, #tpu.memory_space<vmem>>, vector<1x1x8x16xf32>
    %241 = vector.shape_cast %240 : vector<1x1x8x16xf32> to vector<8x16xf32>
    %cst_215 = arith.constant dense<0.000000e+00> : vector<16x16xf32>
    %242 = tpu.matmul %239, %241, %cst_215 {dimension_numbers = #tpu.dot_dimension_numbers<[1], [0], [0], [1], [0, 0, 1, 1], [], []>} : vector<16x8xf32>, vector<8x16xf32>, vector<16x16xf32> -> vector<16x16xf32>
    %243 = arith.addf %202, %242 : vector<16x16xf32>
    %c1_216 = arith.constant 1 : index
    %c0_217 = arith.constant 0 : index
    %c0_218 = arith.constant 0 : index
    %c0_219 = arith.constant 0 : index
    %244 = vector.load %arg8[%c1_216, %c0_217, %c0_218, %c0_219] : memref<2x6x1x16xf32, #tpu.memory_space<vmem>>, vector<1x1x1x16xf32>
    %245 = vector.shape_cast %244 : vector<1x1x1x16xf32> to vector<1x16xf32>
    %246 = vector.broadcast %245 : vector<1x16xf32> to vector<16x16xf32>
    %247 = arith.addf %243, %246 : vector<16x16xf32>
    %248 = arith.addf %162, %247 : vector<16x16xf32>
    %c1_220 = arith.constant 1 : index
    %c1_221 = arith.constant 1 : index
    %c0_222 = arith.constant 0 : index
    %c0_223 = arith.constant 0 : index
    %249 = vector.load %arg8[%c1_220, %c1_221, %c0_222, %c0_223] : memref<2x6x1x16xf32, #tpu.memory_space<vmem>>, vector<1x1x1x16xf32>
    %250 = vector.shape_cast %249 : vector<1x1x1x16xf32> to vector<1x16xf32>
    %c1_224 = arith.constant 1 : index
    %c2_225 = arith.constant 2 : index
    %c0_226 = arith.constant 0 : index
    %c0_227 = arith.constant 0 : index
    %251 = vector.load %arg8[%c1_224, %c2_225, %c0_226, %c0_227] : memref<2x6x1x16xf32, #tpu.memory_space<vmem>>, vector<1x1x1x16xf32>
    %252 = vector.shape_cast %251 : vector<1x1x1x16xf32> to vector<1x16xf32>
    %cst_228 = arith.constant dense<0.000000e+00> : vector<16xf32>
    %253 = vector.multi_reduction <add>, %248, %cst_228 [1] : vector<16x16xf32> to vector<16xf32>
    %254 = vector.shape_cast %253 : vector<16xf32> to vector<16x1xf32>
    %cst_229 = arith.constant 1.600000e+01 : f32
    %255 = vector.broadcast %cst_229 : f32 to vector<16x1xf32>
    %256 = arith.divf %254, %255 : vector<16x1xf32>
    %257 = vector.broadcast %256 : vector<16x1xf32> to vector<16x16xf32>
    %258 = arith.subf %248, %257 : vector<16x16xf32>
    %259 = arith.mulf %258, %258 : vector<16x16xf32>
    %cst_230 = arith.constant dense<0.000000e+00> : vector<16xf32>
    %260 = vector.multi_reduction <add>, %259, %cst_230 [1] : vector<16x16xf32> to vector<16xf32>
    %261 = vector.shape_cast %260 : vector<16xf32> to vector<16x1xf32>
    %cst_231 = arith.constant 1.600000e+01 : f32
    %262 = vector.broadcast %cst_231 : f32 to vector<16x1xf32>
    %263 = arith.divf %261, %262 : vector<16x1xf32>
    %264 = vector.broadcast %256 : vector<16x1xf32> to vector<16x16xf32>
    %265 = arith.subf %248, %264 : vector<16x16xf32>
    %cst_232 = arith.constant 9.99999974E-6 : f32
    %266 = vector.broadcast %cst_232 : f32 to vector<16x1xf32>
    %267 = arith.addf %263, %266 : vector<16x1xf32>
    %268 = math.rsqrt %267 : vector<16x1xf32>
    %269 = vector.broadcast %268 : vector<16x1xf32> to vector<16x16xf32>
    %270 = arith.mulf %265, %269 : vector<16x16xf32>
    %271 = vector.broadcast %250 : vector<1x16xf32> to vector<16x16xf32>
    %272 = arith.mulf %270, %271 : vector<16x16xf32>
    %273 = vector.broadcast %252 : vector<1x16xf32> to vector<16x16xf32>
    %274 = arith.addf %272, %273 : vector<16x16xf32>
    %c1_233 = arith.constant 1 : index
    %c0_234 = arith.constant 0 : index
    %c0_235 = arith.constant 0 : index
    %275 = vector.load %arg9[%c1_233, %c0_234, %c0_235] : memref<2x16x16xf32, #tpu.memory_space<vmem>>, vector<1x16x16xf32>
    %276 = vector.shape_cast %275 : vector<1x16x16xf32> to vector<16x16xf32>
    %cst_236 = arith.constant dense<0.000000e+00> : vector<16x16xf32>
    %277 = tpu.matmul %274, %276, %cst_236 {dimension_numbers = #tpu.dot_dimension_numbers<[1], [0], [0], [1], [0, 0, 1, 1], [], []>} : vector<16x16xf32>, vector<16x16xf32>, vector<16x16xf32> -> vector<16x16xf32>
    %c1_237 = arith.constant 1 : index
    %c0_238 = arith.constant 0 : index
    %c0_239 = arith.constant 0 : index
    %278 = vector.load %arg10[%c1_237, %c0_238, %c0_239] : memref<2x1x16xf32, #tpu.memory_space<vmem>>, vector<1x1x16xf32>
    %279 = vector.shape_cast %278 : vector<1x1x16xf32> to vector<1x16xf32>
    %280 = vector.broadcast %279 : vector<1x16xf32> to vector<16x16xf32>
    %281 = arith.addf %277, %280 : vector<16x16xf32>
    %cst_240 = arith.constant 0.000000e+00 : f32
    %282 = vector.broadcast %cst_240 : f32 to vector<16x16xf32>
    %283 = arith.maximumf %281, %282 : vector<16x16xf32>
    %c1_241 = arith.constant 1 : index
    %c0_242 = arith.constant 0 : index
    %c0_243 = arith.constant 0 : index
    %284 = vector.load %arg11[%c1_241, %c0_242, %c0_243] : memref<2x16x16xf32, #tpu.memory_space<vmem>>, vector<1x16x16xf32>
    %285 = vector.shape_cast %284 : vector<1x16x16xf32> to vector<16x16xf32>
    %cst_244 = arith.constant dense<0.000000e+00> : vector<16x16xf32>
    %286 = tpu.matmul %283, %285, %cst_244 {dimension_numbers = #tpu.dot_dimension_numbers<[1], [0], [0], [1], [0, 0, 1, 1], [], []>} : vector<16x16xf32>, vector<16x16xf32>, vector<16x16xf32> -> vector<16x16xf32>
    %c1_245 = arith.constant 1 : index
    %c5_246 = arith.constant 5 : index
    %c0_247 = arith.constant 0 : index
    %c0_248 = arith.constant 0 : index
    %287 = vector.load %arg8[%c1_245, %c5_246, %c0_247, %c0_248] : memref<2x6x1x16xf32, #tpu.memory_space<vmem>>, vector<1x1x1x16xf32>
    %288 = vector.shape_cast %287 : vector<1x1x1x16xf32> to vector<1x16xf32>
    %289 = vector.broadcast %288 : vector<1x16xf32> to vector<16x16xf32>
    %290 = arith.addf %286, %289 : vector<16x16xf32>
    %291 = arith.addf %274, %290 : vector<16x16xf32>
    %c1_249 = arith.constant 1 : index
    %c3_250 = arith.constant 3 : index
    %c0_251 = arith.constant 0 : index
    %c0_252 = arith.constant 0 : index
    %292 = vector.load %arg8[%c1_249, %c3_250, %c0_251, %c0_252] : memref<2x6x1x16xf32, #tpu.memory_space<vmem>>, vector<1x1x1x16xf32>
    %293 = vector.shape_cast %292 : vector<1x1x1x16xf32> to vector<1x16xf32>
    %c1_253 = arith.constant 1 : index
    %c4_254 = arith.constant 4 : index
    %c0_255 = arith.constant 0 : index
    %c0_256 = arith.constant 0 : index
    %294 = vector.load %arg8[%c1_253, %c4_254, %c0_255, %c0_256] : memref<2x6x1x16xf32, #tpu.memory_space<vmem>>, vector<1x1x1x16xf32>
    %295 = vector.shape_cast %294 : vector<1x1x1x16xf32> to vector<1x16xf32>
    %cst_257 = arith.constant dense<0.000000e+00> : vector<16xf32>
    %296 = vector.multi_reduction <add>, %291, %cst_257 [1] : vector<16x16xf32> to vector<16xf32>
    %297 = vector.shape_cast %296 : vector<16xf32> to vector<16x1xf32>
    %cst_258 = arith.constant 1.600000e+01 : f32
    %298 = vector.broadcast %cst_258 : f32 to vector<16x1xf32>
    %299 = arith.divf %297, %298 : vector<16x1xf32>
    %300 = vector.broadcast %299 : vector<16x1xf32> to vector<16x16xf32>
    %301 = arith.subf %291, %300 : vector<16x16xf32>
    %302 = arith.mulf %301, %301 : vector<16x16xf32>
    %cst_259 = arith.constant dense<0.000000e+00> : vector<16xf32>
    %303 = vector.multi_reduction <add>, %302, %cst_259 [1] : vector<16x16xf32> to vector<16xf32>
    %304 = vector.shape_cast %303 : vector<16xf32> to vector<16x1xf32>
    %cst_260 = arith.constant 1.600000e+01 : f32
    %305 = vector.broadcast %cst_260 : f32 to vector<16x1xf32>
    %306 = arith.divf %304, %305 : vector<16x1xf32>
    %307 = vector.broadcast %299 : vector<16x1xf32> to vector<16x16xf32>
    %308 = arith.subf %291, %307 : vector<16x16xf32>
    %cst_261 = arith.constant 9.99999974E-6 : f32
    %309 = vector.broadcast %cst_261 : f32 to vector<16x1xf32>
    %310 = arith.addf %306, %309 : vector<16x1xf32>
    %311 = math.rsqrt %310 : vector<16x1xf32>
    %312 = vector.broadcast %311 : vector<16x1xf32> to vector<16x16xf32>
    %313 = arith.mulf %308, %312 : vector<16x16xf32>
    %314 = vector.broadcast %293 : vector<1x16xf32> to vector<16x16xf32>
    %315 = arith.mulf %313, %314 : vector<16x16xf32>
    %316 = vector.broadcast %295 : vector<1x16xf32> to vector<16x16xf32>
    %317 = arith.addf %315, %316 : vector<16x16xf32>
    %c0_262 = arith.constant 0 : index
    %c0_263 = arith.constant 0 : index
    %318 = vector.load %arg12[%c0_262, %c0_263] : memref<16x8xf32, #tpu.memory_space<vmem>>, vector<16x8xf32>
    %cst_264 = arith.constant dense<0.000000e+00> : vector<16x8xf32>
    %319 = tpu.matmul %317, %318, %cst_264 {dimension_numbers = #tpu.dot_dimension_numbers<[1], [0], [0], [1], [0, 0, 1, 1], [], []>} : vector<16x16xf32>, vector<16x8xf32>, vector<16x8xf32> -> vector<16x8xf32>
    %c0_265 = arith.constant 0 : index
    %c0_266 = arith.constant 0 : index
    %320 = vector.load %arg13[%c0_265, %c0_266] : memref<1x8xf32, #tpu.memory_space<vmem>>, vector<1x8xf32>
    %321 = vector.broadcast %320 : vector<1x8xf32> to vector<16x8xf32>
    %322 = arith.addf %319, %321 : vector<16x8xf32>
    %c0_267 = arith.constant 0 : index
    %c0_268 = arith.constant 0 : index
    %323 = vector.load %arg14[%c0_267, %c0_268] : memref<16x8xf32, #tpu.memory_space<vmem>>, vector<16x8xf32>
    tpu.vector_store %arg14[%c0_267, %c0_268], %322 {strides = array<i32>} : memref<16x8xf32, #tpu.memory_space<vmem>>, vector<16x8xf32>,
    return
  }
  func.func @transform_0(%arg0: i32) -> (i32, i32) {
    %c0_i32 = arith.constant 0 : i32
    %c0_i32_0 = arith.constant 0 : i32
    return %arg0, %c0_i32 : i32, i32
  }
  func.func @transform_1(%arg0: i32) -> (i32, i32) {
    %c0_i32 = arith.constant 0 : i32
    %c0_i32_0 = arith.constant 0 : i32
    %c0_i32_1 = arith.constant 0 : i32
    return %c0_i32, %c0_i32_0 : i32, i32
  }
  func.func @transform_2(%arg0: i32) -> (i32, i32) {
    %c0_i32 = arith.constant 0 : i32
    %c0_i32_0 = arith.constant 0 : i32
    %c0_i32_1 = arith.constant 0 : i32
    return %c0_i32, %c0_i32_0 : i32, i32
  }
  func.func @transform_3(%arg0: i32) -> (i32, i32) {
    %c0_i32 = arith.constant 0 : i32
    %c0_i32_0 = arith.constant 0 : i32
    %c0_i32_1 = arith.constant 0 : i32
    return %c0_i32, %c0_i32_0 : i32, i32
  }
  func.func @transform_4(%arg0: i32) -> (i32, i32, i32, i32, i32) {
    %c0_i32 = arith.constant 0 : i32
    %c0_i32_0 = arith.constant 0 : i32
    %c0_i32_1 = arith.constant 0 : i32
    %c0_i32_2 = arith.constant 0 : i32
    %c0_i32_3 = arith.constant 0 : i32
    %c0_i32_4 = arith.constant 0 : i32
    return %c0_i32, %c0_i32_0, %c0_i32_1, %c0_i32_2, %c0_i32_3 : i32, i32, i32, i32, i32
  }
  func.func @transform_5(%arg0: i32) -> (i32, i32, i32, i32, i32) {
    %c0_i32 = arith.constant 0 : i32
    %c0_i32_0 = arith.constant 0 : i32
    %c0_i32_1 = arith.constant 0 : i32
    %c0_i32_2 = arith.constant 0 : i32
    %c0_i32_3 = arith.constant 0 : i32
    %c0_i32_4 = arith.constant 0 : i32
    return %c0_i32, %c0_i32_0, %c0_i32_1, %c0_i32_2, %c0_i32_3 : i32, i32, i32, i32, i32
  }
  func.func @transform_6(%arg0: i32) -> (i32, i32, i32, i32) {
    %c0_i32 = arith.constant 0 : i32
    %c0_i32_0 = arith.constant 0 : i32
    %c0_i32_1 = arith.constant 0 : i32
    %c0_i32_2 = arith.constant 0 : i32
    %c0_i32_3 = arith.constant 0 : i32
    return %c0_i32, %c0_i32_0, %c0_i32_1, %c0_i32_2 : i32, i32, i32, i32
  }
  func.func @transform_7(%arg0: i32) -> (i32, i32, i32, i32) {
    %c0_i32 = arith.constant 0 : i32
    %c0_i32_0 = arith.constant 0 : i32
    %c0_i32_1 = arith.constant 0 : i32
    %c0_i32_2 = arith.constant 0 : i32
    %c0_i32_3 = arith.constant 0 : i32
    return %c0_i32, %c0_i32_0, %c0_i32_1, %c0_i32_2 : i32, i32, i32, i32
  }
  func.func @transform_8(%arg0: i32) -> (i32, i32, i32) {
    %c0_i32 = arith.constant 0 : i32
    %c0_i32_0 = arith.constant 0 : i32
    %c0_i32_1 = arith.constant 0 : i32
    %c0_i32_2 = arith.constant 0 : i32
    return %c0_i32, %c0_i32_0, %c0_i32_1 : i32, i32, i32
  }
  func.func @transform_9(%arg0: i32) -> (i32, i32, i32) {
    %c0_i32 = arith.constant 0 : i32
    %c0_i32_0 = arith.constant 0 : i32
    %c0_i32_1 = arith.constant 0 : i32
    %c0_i32_2 = arith.constant 0 : i32
    return %c0_i32, %c0_i32_0, %c0_i32_1 : i32, i32, i32
  }
  func.func @transform_10(%arg0: i32) -> (i32, i32, i32) {
    %c0_i32 = arith.constant 0 : i32
    %c0_i32_0 = arith.constant 0 : i32
    %c0_i32_1 = arith.constant 0 : i32
    %c0_i32_2 = arith.constant 0 : i32
    return %c0_i32, %c0_i32_0, %c0_i32_1 : i32, i32, i32
  }
  func.func @transform_11(%arg0: i32) -> (i32, i32) {
    %c0_i32 = arith.constant 0 : i32
    %c0_i32_0 = arith.constant 0 : i32
    %c0_i32_1 = arith.constant 0 : i32
    return %c0_i32, %c0_i32_0 : i32, i32
  }
  func.func @transform_12(%arg0: i32) -> (i32, i32) {
    %c0_i32 = arith.constant 0 : i32
    %c0_i32_0 = arith.constant 0 : i32
    %c0_i32_1 = arith.constant 0 : i32
    return %c0_i32, %c0_i32_0 : i32, i32
  }
  func.func @transform_13(%arg0: i32) -> (i32, i32) {
    %c0_i32 = arith.constant 0 : i32
    %c0_i32_0 = arith.constant 0 : i32
    return %arg0, %c0_i32 : i32, i32
  }
}

</mosaic_0001>

<llo_original>
// kernel: tpu_custom_call.1
$region0: #{tpu_custom_call.1}
  #allocation0 [shape = 'u32[]', space=smem, size = 0x4, offset = 0x4, fixed_abs, tag = 'smem constant byte address 0x4 - core index']
  #allocation1 [shape = 'u32[72,128]{1,0:T(1,128)}', space=vmem, size = 0x9000, scoped, tag = 'internal scratch']
  %s0 = inlined_call_operand.vmem [shape: f32[16,4], index: 0, kind: input, shape index: {}]
  %s1 = inlined_call_operand.vmem [shape: f32[16,16], index: 1, kind: input, shape index: {}]
  %s2 = inlined_call_operand.vmem [shape: f32[4,16], index: 2, kind: input, shape index: {}]
  %s3 = inlined_call_operand.vmem [shape: f32[1,16], index: 3, kind: input, shape index: {}]
  %s4 = inlined_call_operand.vmem [shape: f32[2,3,2,16,8], index: 4, kind: input, shape index: {}]
  %s5 = inlined_call_operand.vmem [shape: f32[2,3,2,1,8], index: 5, kind: input, shape index: {}]
  %s6 = inlined_call_operand.vmem [shape: f32[2,2,8,16], index: 6, kind: input, shape index: {}]
  %s7 = inlined_call_operand.vmem [shape: f32[2,6,1,16], index: 7, kind: input, shape index: {}]
  %s8 = inlined_call_operand.vmem [shape: f32[2,16,16], index: 8, kind: input, shape index: {}]
  %s9 = inlined_call_operand.vmem [shape: f32[2,1,16], index: 9, kind: input, shape index: {}]
  %s10 = inlined_call_operand.vmem [shape: f32[2,16,16], index: 10, kind: input, shape index: {}]
  %s11 = inlined_call_operand.vmem [shape: f32[16,8], index: 11, kind: input, shape index: {}]
  %s12 = inlined_call_operand.vmem [shape: f32[1,8], index: 12, kind: input, shape index: {}]
  %s13 = inlined_call_operand.vmem [shape: f32[16,8], index: 13, kind: output, shape index: {}]
  %s14 = sld [smem:[#allocation0]]
  $region62: #{tpu_custom_call.1} parent=0
    _
  %s16 = ssub.s32 1, %s14
  %s17 = scalar_select 0, %s16, %s14
  // Predicated region
  $region2: #{tpu_custom_call.1} parent=0 // pred_check
    _
  $region3: #{tpu_custom_call.1} parent=0 // pred_check_branch
    %19 = sbr.rel (0) target = $region5
  $region4: #{tpu_custom_call.1} parent=0 // pred_region
    _
  $region5: #{tpu_custom_call.1} parent=0 // pred_fallthru
    _
  // Predicated region
  $region6: #{tpu_custom_call.1} parent=0 // pred_check
    _
  $region7: #{tpu_custom_call.1} parent=0 // pred_check_branch
    %21 = sbr.rel (0) target = $region9
  $region8: #{tpu_custom_call.1} parent=0 // pred_region
    _
  $region9: #{tpu_custom_call.1} parent=0 // pred_fallthru
    _
  // Predicated region
  $region10: #{tpu_custom_call.1} parent=0 // pred_check
    _
  $region11: #{tpu_custom_call.1} parent=0 // pred_check_branch
    %23 = sbr.rel (0) target = $region13
  $region12: #{tpu_custom_call.1} parent=0 // pred_region
    _
  $region13: #{tpu_custom_call.1} parent=0 // pred_fallthru
    _
  // Predicated region
  $region14: #{tpu_custom_call.1} parent=0 // pred_check
    _
  $region15: #{tpu_custom_call.1} parent=0 // pred_check_branch
    %25 = sbr.rel (0) target = $region17
  $region16: #{tpu_custom_call.1} parent=0 // pred_region
    _
  $region17: #{tpu_custom_call.1} parent=0 // pred_fallthru
    _
  // Predicated region
  $region18: #{tpu_custom_call.1} parent=0 // pred_check
    _
  $region19: #{tpu_custom_call.1} parent=0 // pred_check_branch
    %27 = sbr.rel (0) target = $region21
  $region20: #{tpu_custom_call.1} parent=0 // pred_region
    _
  $region21: #{tpu_custom_call.1} parent=0 // pred_fallthru
    _
  // Predicated region
  $region22: #{tpu_custom_call.1} parent=0 // pred_check
    _
  $region23: #{tpu_custom_call.1} parent=0 // pred_check_branch
    %29 = sbr.rel (0) target = $region25
  $region24: #{tpu_custom_call.1} parent=0 // pred_region
    _
  $region25: #{tpu_custom_call.1} parent=0 // pred_fallthru
    _
  // Predicated region
  $region26: #{tpu_custom_call.1} parent=0 // pred_check
    _
  $region27: #{tpu_custom_call.1} parent=0 // pred_check_branch
    %31 = sbr.rel (0) target = $region29
  $region28: #{tpu_custom_call.1} parent=0 // pred_region
    _
  $region29: #{tpu_custom_call.1} parent=0 // pred_fallthru
    _
  // Predicated region
  $region30: #{tpu_custom_call.1} parent=0 // pred_check
    _
  $region31: #{tpu_custom_call.1} parent=0 // pred_check_branch
    %33 = sbr.rel (0) target = $region33
  $region32: #{tpu_custom_call.1} parent=0 // pred_region
    _
  $region33: #{tpu_custom_call.1} parent=0 // pred_fallthru
    _
  // Predicated region
  $region34: #{tpu_custom_call.1} parent=0 // pred_check
    _
  $region35: #{tpu_custom_call.1} parent=0 // pred_check_branch
    %35 = sbr.rel (0) target = $region37
  $region36: #{tpu_custom_call.1} parent=0 // pred_region
    _
  $region37: #{tpu_custom_call.1} parent=0 // pred_fallthru
    _
  // Predicated region
  $region38: #{tpu_custom_call.1} parent=0 // pred_check
    _
  $region39: #{tpu_custom_call.1} parent=0 // pred_check_branch
    %37 = sbr.rel (0) target = $region41
  $region40: #{tpu_custom_call.1} parent=0 // pred_region
    _
  $region41: #{tpu_custom_call.1} parent=0 // pred_fallthru
    _
  // Predicated region
  $region42: #{tpu_custom_call.1} parent=0 // pred_check
    _
  $region43: #{tpu_custom_call.1} parent=0 // pred_check_branch
    %39 = sbr.rel (0) target = $region45
  $region44: #{tpu_custom_call.1} parent=0 // pred_region
    _
  $region45: #{tpu_custom_call.1} parent=0 // pred_fallthru
    _
  // Predicated region
  $region46: #{tpu_custom_call.1} parent=0 // pred_check
    _
  $region47: #{tpu_custom_call.1} parent=0 // pred_check_branch
    %41 = sbr.rel (0) target = $region49
  $region48: #{tpu_custom_call.1} parent=0 // pred_region
    _
  $region49: #{tpu_custom_call.1} parent=0 // pred_fallthru
    _
  // Predicated region
  $region50: #{tpu_custom_call.1} parent=0 // pred_check
    _
  $region51: #{tpu_custom_call.1} parent=0 // pred_check_branch
    %43 = sbr.rel (0) target = $region53
  $region52: #{tpu_custom_call.1} parent=0 // pred_region
    _
  $region53: #{tpu_custom_call.1} parent=0 // pred_fallthru
    _
  %v44 = vld [vmem:[%s0] sm:$0xff]
  %v45 = vld [vmem:[%s0 + $0x8] sm:$0xff]
  %v46 = vld [vmem:[%s2] sm:$0xf]
  %v47 = vld [vmem:[%s3] sm:$0x1]
  %v49 = vperm.slane %v47, 0
  %vm51 = vcmask 31744
  %v53 = vsel %vm51, %v44, 0
  %v56 = vsel %vm51, %v45, 0
  %vm58 = vcmask 1043456
  %v60 = vsel %vm58, %v46, 0
  %62 = vmatpush.msra.mxu0 0.0
  %63 = vmatpush.msra.mxu0 0.0
  %64 = vmatpush.msra.mxu0 0.0
  %65 = vmatpush.msra.mxu0 0.0
  %66 = vmatpush.msra.mxu0 0.0
  %67 = vmatpush.msra.mxu0 0.0
  %68 = vmatpush.msra.mxu0 0.0
  %69 = vmatpush.msra.mxu0 0.0
  %70 = vmatpush.msra.mxu0 0.0
  %71 = vmatpush.msra.mxu0 0.0
  %72 = vmatpush.msra.mxu0 0.0
  %73 = vmatpush.msra.mxu0 0.0
  %74 = vmatpush.msra.mxu0 0.0
  %75 = vmatpush.msra.mxu0 0.0
  %76 = vmatpush.msra.mxu0 0.0
  %77 = vmatpush.msra.mxu0 %v60
  %78 = vmatmul.f32.gmra.mxu0 %v53
  %v79 = vpop.f32.mrf.mxu0
  %v80 = vadd.f32 %v49, %v79
  %81 = vmatmul.f32.gmra.mxu0 %v56
  %v82 = vpop.f32.mrf.mxu0
  %v83 = vadd.f32 %v49, %v82
  %84 = vdwg.mxu0
  %v85 = vld [vmem:[%s1] sm:$0xff]
  %v86 = vld [vmem:[%s1 + $0x8] sm:$0xff]
  %v87 = vadd.f32 %v80, %v85
  %v88 = vadd.f32 %v83, %v86
  %v89 = vld [vmem:[%s4] sm:$0xff]
  %v90 = vld [vmem:[%s4 + $0x8] sm:$0xff]
  %v91 = vld [vmem:[%s5] sm:$0x1]
  %v93 = vperm.slane %v91, 0
  %vm95 = vcmask 130048
  %v97 = vsel %vm95, %v87, 0
  %v100 = vsel %vm95, %v88, 0
  %102 = vmatpush.msra.mxu0 0.0
  %103 = vmatpush.msra.mxu0 0.0
  %104 = vmatpush.msra.mxu0 0.0
  %105 = vmatpush.msra.mxu0 0.0
  %106 = vmatpush.msra.mxu0 0.0
  %107 = vmatpush.msra.mxu0 0.0
  %108 = vmatpush.msra.mxu0 0.0
  %109 = vmatpush.msra.mxu0 0.0
  %110 = vmatpush.msra.mxu0 0.0
  %111 = vmatpush.msra.mxu0 0.0
  %112 = vmatpush.msra.mxu0 0.0
  %113 = vmatpush.msra.mxu0 0.0
  %114 = vmatpush.msra.mxu0 0.0
  %115 = vmatpush.msra.mxu0 0.0
  %116 = vmatpush.msra.mxu0 %v90
  %117 = vmatpush.msra.mxu0 %v89
  %118 = vmatmul.f32.gmra.mxu0 %v97
  %v119 = vpop.f32.mrf.mxu0
  %v120 = vadd.f32 %v93, %v119
  %121 = vmatmul.f32.gmra.mxu0 %v100
  %v122 = vpop.f32.mrf.mxu0
  %v123 = vadd.f32 %v93, %v122
  %124 = vdwg.mxu0
  %s125 = scalar_lea.vmem %s4, 32
  %v126 = vld [vmem:[%s125] sm:$0xff]
  %v127 = vld [vmem:[%s125 + $0x8] sm:$0xff]
  %s128 = scalar_lea.vmem %s5, 2
  %v129 = vld [vmem:[%s128] sm:$0x1]
  %v131 = vperm.slane %v129, 0
  %133 = vmatpush.msra.mxu0 0.0
  %134 = vmatpush.msra.mxu0 0.0
  %135 = vmatpush.msra.mxu0 0.0
  %136 = vmatpush.msra.mxu0 0.0
  %137 = vmatpush.msra.mxu0 0.0
  %138 = vmatpush.msra.mxu0 0.0
  %139 = vmatpush.msra.mxu0 0.0
  %140 = vmatpush.msra.mxu0 0.0
  %141 = vmatpush.msra.mxu0 0.0
  %142 = vmatpush.msra.mxu0 0.0
  %143 = vmatpush.msra.mxu0 0.0
  %144 = vmatpush.msra.mxu0 0.0
  %145 = vmatpush.msra.mxu0 0.0
  %146 = vmatpush.msra.mxu0 0.0
  %147 = vmatpush.msra.mxu0 %v127
  %148 = vmatpush.msra.mxu0 %v126
  %149 = vmatmul.f32.gmra.mxu0 %v97
  %v150 = vpop.f32.mrf.mxu0
  %v151 = vadd.f32 %v131, %v150
  %152 = vmatmul.f32.gmra.mxu0 %v100
  %v153 = vpop.f32.mrf.mxu0
  %v154 = vadd.f32 %v131, %v153
  %155 = vdwg.mxu0
  %s156 = scalar_lea.vmem %s4, 64
  %v157 = vld [vmem:[%s156] sm:$0xff]
  %v158 = vld [vmem:[%s156 + $0x8] sm:$0xff]
  %s159 = scalar_lea.vmem %s5, 4
  %v160 = vld [vmem:[%s159] sm:$0x1]
  %v162 = vperm.slane %v160, 0
  %164 = vmatpush.msra.mxu0 0.0
  %165 = vmatpush.msra.mxu0 0.0
  %166 = vmatpush.msra.mxu0 0.0
  %167 = vmatpush.msra.mxu0 0.0
  %168 = vmatpush.msra.mxu0 0.0
  %169 = vmatpush.msra.mxu0 0.0
  %170 = vmatpush.msra.mxu0 0.0
  %171 = vmatpush.msra.mxu0 0.0
  %172 = vmatpush.msra.mxu0 0.0
  %173 = vmatpush.msra.mxu0 0.0
  %174 = vmatpush.msra.mxu0 0.0
  %175 = vmatpush.msra.mxu0 0.0
  %176 = vmatpush.msra.mxu0 0.0
  %177 = vmatpush.msra.mxu0 0.0
  %178 = vmatpush.msra.mxu0 %v158
  %179 = vmatpush.msra.mxu0 %v157
  %180 = vmatmul.f32.gmra.mxu0 %v97
  %v181 = vpop.f32.mrf.mxu0
  %v182 = vadd.f32 %v162, %v181
  %183 = vmatmul.f32.gmra.mxu0 %v100
  %v184 = vpop.f32.mrf.mxu0
  %v185 = vadd.f32 %v162, %v184
  %186 = vdwg.mxu0
  %vm187 = vcmask 64512
  %v189 = vsel %vm187, %v120, 0
  %v192 = vsel %vm187, %v151, 0
  %194 = vmatpush.xpose.msra.mxu0 0.0
  %195 = vmatpush.xpose.msra.mxu0 0.0
  %196 = vmatpush.xpose.msra.mxu0 0.0
  %197 = vmatpush.xpose.msra.mxu0 0.0
  %198 = vmatpush.xpose.msra.mxu0 0.0
  %199 = vmatpush.xpose.msra.mxu0 0.0
  %200 = vmatpush.xpose.msra.mxu0 0.0
  %201 = vmatpush.xpose.msra.mxu0 0.0
  %202 = vmatpush.xpose.msra.mxu0 0.0
  %203 = vmatpush.xpose.msra.mxu0 0.0
  %204 = vmatpush.xpose.msra.mxu0 0.0
  %205 = vmatpush.xpose.msra.mxu0 0.0
  %206 = vmatpush.xpose.msra.mxu0 0.0
  %207 = vmatpush.xpose.msra.mxu0 0.0
  %208 = vmatpush.xpose.msra.mxu0 0.0
  %209 = vmatpush.xpose.msra.mxu0 %v192
  %210 = vmatmul.f32.gmra.mxu0 %v189
  %v211 = vpop.f32.mrf.mxu0
  %v212 = vadd.f32 0.0, %v211
  %213 = vdwg.mxu0
  %v215 = vsel %vm187, %v123, 0
  %v218 = vsel %vm187, %v154, 0
  %220 = vmatpush.xpose.msra.mxu0 0.0
  %221 = vmatpush.xpose.msra.mxu0 0.0
  %222 = vmatpush.xpose.msra.mxu0 0.0
  %223 = vmatpush.xpose.msra.mxu0 0.0
  %224 = vmatpush.xpose.msra.mxu0 0.0
  %225 = vmatpush.xpose.msra.mxu0 0.0
  %226 = vmatpush.xpose.msra.mxu0 0.0
  %227 = vmatpush.xpose.msra.mxu0 0.0
  %228 = vmatpush.xpose.msra.mxu0 0.0
  %229 = vmatpush.xpose.msra.mxu0 0.0
  %230 = vmatpush.xpose.msra.mxu0 0.0
  %231 = vmatpush.xpose.msra.mxu0 0.0
  %232 = vmatpush.xpose.msra.mxu0 0.0
  %233 = vmatpush.xpose.msra.mxu0 0.0
  %234 = vmatpush.xpose.msra.mxu0 0.0
  %235 = vmatpush.xpose.msra.mxu0 %v218
  %236 = vmatmul.f32.gmra.mxu0 %v215
  %v237 = vpop.f32.mrf.mxu0
  %v238 = vadd.f32 0.0, %v237
  %239 = vdwg.mxu0
  %v240 = vsel %vm187, %v212, -inf
  %241 = vmax.xlane.f32.xlu0 %v240
  %v242 = vpop.xlane.xlu0 %241
  %v243 = vsel %vm187, %v238, -inf
  %244 = vmax.xlane.f32.xlu0 %v243
  %v245 = vpop.xlane.xlu0 %244
  %v246 = vsub.f32 %v212, %v242
  %v247 = vsub.f32 %v238, %v245
  %v248 = vmul.f32 %v246, 1.442695
  %v249 = vpow.pop %v248
  %v250 = vmul.f32 %v247, 1.442695
  %v251 = vpow.pop %v250
  %v252 = vsel %vm187, %v249, 0.0
  %253 = vadd.xlane.f32.xlu0 %v252
  %v254 = vpop.xlane.xlu0 %253
  %v255 = vsel %vm187, %v251, 0.0
  %256 = vadd.xlane.f32.xlu0 %v255
  %v257 = vpop.xlane.xlu0 %256
  %v258 = vrcp.pop %v254
  %v259 = vrcp.pop %v257
  %v260 = vmul.f32 %v249, %v258
  %v261 = vmul.f32 %v251, %v259
  %v263 = vsel %vm187, %v260, 0
  %265 = vmatpush.msra.mxu0 0.0
  %266 = vmatpush.msra.mxu0 0.0
  %267 = vmatpush.msra.mxu0 0.0
  %268 = vmatpush.msra.mxu0 0.0
  %269 = vmatpush.msra.mxu0 0.0
  %270 = vmatpush.msra.mxu0 0.0
  %271 = vmatpush.msra.mxu0 0.0
  %272 = vmatpush.msra.mxu0 0.0
  %273 = vmatpush.msra.mxu0 0.0
  %274 = vmatpush.msra.mxu0 0.0
  %275 = vmatpush.msra.mxu0 0.0
  %276 = vmatpush.msra.mxu0 0.0
  %277 = vmatpush.msra.mxu0 0.0
  %278 = vmatpush.msra.mxu0 0.0
  %279 = vmatpush.msra.mxu0 0.0
  %280 = vmatpush.msra.mxu0 %v182
  %281 = vmatmul.f32.gmra.mxu0 %v263
  %v282 = vpop.f32.mrf.mxu0
  %v283 = vadd.f32 0.0, %v282
  %284 = vdwg.mxu0
  %v286 = vsel %vm187, %v261, 0
  %288 = vmatpush.msra.mxu0 0.0
  %289 = vmatpush.msra.mxu0 0.0
  %290 = vmatpush.msra.mxu0 0.0
  %291 = vmatpush.msra.mxu0 0.0
  %292 = vmatpush.msra.mxu0 0.0
  %293 = vmatpush.msra.mxu0 0.0
  %294 = vmatpush.msra.mxu0 0.0
  %295 = vmatpush.msra.mxu0 0.0
  %296 = vmatpush.msra.mxu0 0.0
  %297 = vmatpush.msra.mxu0 0.0
  %298 = vmatpush.msra.mxu0 0.0
  %299 = vmatpush.msra.mxu0 0.0
  %300 = vmatpush.msra.mxu0 0.0
  %301 = vmatpush.msra.mxu0 0.0
  %302 = vmatpush.msra.mxu0 0.0
  %303 = vmatpush.msra.mxu0 %v185
  %304 = vmatmul.f32.gmra.mxu0 %v286
  %v305 = vpop.f32.mrf.mxu0
  %v306 = vadd.f32 0.0, %v305
  %307 = vdwg.mxu0
  %v308 = vld [vmem:[%s6] sm:$0xff]
  %s309 = scalar_lea.vmem %s4, 16
  %v310 = vld [vmem:[%s309] sm:$0xff]
  %v311 = vld [vmem:[%s309 + $0x8] sm:$0xff]
  %s312 = scalar_lea.vmem %s5, 1
  %v313 = vld [vmem:[%s312] sm:$0x1]
  %v315 = vperm.slane %v313, 0
  %317 = vmatpush.msra.mxu0 0.0
  %318 = vmatpush.msra.mxu0 0.0
  %319 = vmatpush.msra.mxu0 0.0
  %320 = vmatpush.msra.mxu0 0.0
  %321 = vmatpush.msra.mxu0 0.0
  %322 = vmatpush.msra.mxu0 0.0
  %323 = vmatpush.msra.mxu0 0.0
  %324 = vmatpush.msra.mxu0 0.0
  %325 = vmatpush.msra.mxu0 0.0
  %326 = vmatpush.msra.mxu0 0.0
  %327 = vmatpush.msra.mxu0 0.0
  %328 = vmatpush.msra.mxu0 0.0
  %329 = vmatpush.msra.mxu0 0.0
  %330 = vmatpush.msra.mxu0 0.0
  %331 = vmatpush.msra.mxu0 %v311
  %332 = vmatpush.msra.mxu0 %v310
  %333 = vmatmul.f32.gmra.mxu0 %v97
  %v334 = vpop.f32.mrf.mxu0
  %v335 = vadd.f32 %v315, %v334
  %336 = vmatmul.f32.gmra.mxu0 %v100
  %v337 = vpop.f32.mrf.mxu0
  %v338 = vadd.f32 %v315, %v337
  %339 = vdwg.mxu0
  %s340 = scalar_lea.vmem %s4, 48
  %v341 = vld [vmem:[%s340] sm:$0xff]
  %v342 = vld [vmem:[%s340 + $0x8] sm:$0xff]
  %s343 = scalar_lea.vmem %s5, 3
  %v344 = vld [vmem:[%s343] sm:$0x1]
  %v346 = vperm.slane %v344, 0
  %348 = vmatpush.msra.mxu0 0.0
  %349 = vmatpush.msra.mxu0 0.0
  %350 = vmatpush.msra.mxu0 0.0
  %351 = vmatpush.msra.mxu0 0.0
  %352 = vmatpush.msra.mxu0 0.0
  %353 = vmatpush.msra.mxu0 0.0
  %354 = vmatpush.msra.mxu0 0.0
  %355 = vmatpush.msra.mxu0 0.0
  %356 = vmatpush.msra.mxu0 0.0
  %357 = vmatpush.msra.mxu0 0.0
  %358 = vmatpush.msra.mxu0 0.0
  %359 = vmatpush.msra.mxu0 0.0
  %360 = vmatpush.msra.mxu0 0.0
  %361 = vmatpush.msra.mxu0 0.0
  %362 = vmatpush.msra.mxu0 %v342
  %363 = vmatpush.msra.mxu0 %v341
  %364 = vmatmul.f32.gmra.mxu0 %v97
  %v365 = vpop.f32.mrf.mxu0
  %v366 = vadd.f32 %v346, %v365
  %367 = vmatmul.f32.gmra.mxu0 %v100
  %v368 = vpop.f32.mrf.mxu0
  %v369 = vadd.f32 %v346, %v368
  %370 = vdwg.mxu0
  %s371 = scalar_lea.vmem %s4, 80
  %v372 = vld [vmem:[%s371] sm:$0xff]
  %v373 = vld [vmem:[%s371 + $0x8] sm:$0xff]
  %s374 = scalar_lea.vmem %s5, 5
  %v375 = vld [vmem:[%s374] sm:$0x1]
  %v377 = vperm.slane %v375, 0
  %379 = vmatpush.msra.mxu0 0.0
  %380 = vmatpush.msra.mxu0 0.0
  %381 = vmatpush.msra.mxu0 0.0
  %382 = vmatpush.msra.mxu0 0.0
  %383 = vmatpush.msra.mxu0 0.0
  %384 = vmatpush.msra.mxu0 0.0
  %385 = vmatpush.msra.mxu0 0.0
  %386 = vmatpush.msra.mxu0 0.0
  %387 = vmatpush.msra.mxu0 0.0
  %388 = vmatpush.msra.mxu0 0.0
  %389 = vmatpush.msra.mxu0 0.0
  %390 = vmatpush.msra.mxu0 0.0
  %391 = vmatpush.msra.mxu0 0.0
  %392 = vmatpush.msra.mxu0 0.0
  %393 = vmatpush.msra.mxu0 %v373
  %394 = vmatpush.msra.mxu0 %v372
  %395 = vmatmul.f32.gmra.mxu0 %v97
  %v396 = vpop.f32.mrf.mxu0
  %v397 = vadd.f32 %v377, %v396
  %398 = vmatmul.f32.gmra.mxu0 %v100
  %v399 = vpop.f32.mrf.mxu0
  %v400 = vadd.f32 %v377, %v399
  %401 = vdwg.mxu0
  %v403 = vsel %vm187, %v335, 0
  %v406 = vsel %vm187, %v366, 0
  %408 = vmatpush.xpose.msra.mxu0 0.0
  %409 = vmatpush.xpose.msra.mxu0 0.0
  %410 = vmatpush.xpose.msra.mxu0 0.0
  %411 = vmatpush.xpose.msra.mxu0 0.0
  %412 = vmatpush.xpose.msra.mxu0 0.0
  %413 = vmatpush.xpose.msra.mxu0 0.0
  %414 = vmatpush.xpose.msra.mxu0 0.0
  %415 = vmatpush.xpose.msra.mxu0 0.0
  %416 = vmatpush.xpose.msra.mxu0 0.0
  %417 = vmatpush.xpose.msra.mxu0 0.0
  %418 = vmatpush.xpose.msra.mxu0 0.0
  %419 = vmatpush.xpose.msra.mxu0 0.0
  %420 = vmatpush.xpose.msra.mxu0 0.0
  %421 = vmatpush.xpose.msra.mxu0 0.0
  %422 = vmatpush.xpose.msra.mxu0 0.0
  %423 = vmatpush.xpose.msra.mxu0 %v406
  %424 = vmatmul.f32.gmra.mxu0 %v403
  %v425 = vpop.f32.mrf.mxu0
  %v426 = vadd.f32 0.0, %v425
  %427 = vdwg.mxu0
  %v429 = vsel %vm187, %v338, 0
  %v432 = vsel %vm187, %v369, 0
  %434 = vmatpush.xpose.msra.mxu0 0.0
  %435 = vmatpush.xpose.msra.mxu0 0.0
  %436 = vmatpush.xpose.msra.mxu0 0.0
  %437 = vmatpush.xpose.msra.mxu0 0.0
  %438 = vmatpush.xpose.msra.mxu0 0.0
  %439 = vmatpush.xpose.msra.mxu0 0.0
  %440 = vmatpush.xpose.msra.mxu0 0.0
  %441 = vmatpush.xpose.msra.mxu0 0.0
  %442 = vmatpush.xpose.msra.mxu0 0.0
  %443 = vmatpush.xpose.msra.mxu0 0.0
  %444 = vmatpush.xpose.msra.mxu0 0.0
  %445 = vmatpush.xpose.msra.mxu0 0.0
  %446 = vmatpush.xpose.msra.mxu0 0.0
  %447 = vmatpush.xpose.msra.mxu0 0.0
  %448 = vmatpush.xpose.msra.mxu0 0.0
  %449 = vmatpush.xpose.msra.mxu0 %v432
  %450 = vmatmul.f32.gmra.mxu0 %v429
  %v451 = vpop.f32.mrf.mxu0
  %v452 = vadd.f32 0.0, %v451
  %453 = vdwg.mxu0
  %v454 = vsel %vm187, %v426, -inf
  %455 = vmax.xlane.f32.xlu0 %v454
  %v456 = vpop.xlane.xlu0 %455
  %v457 = vsel %vm187, %v452, -inf
  %458 = vmax.xlane.f32.xlu0 %v457
  %v459 = vpop.xlane.xlu0 %458
  %v460 = vsub.f32 %v426, %v456
  %v461 = vsub.f32 %v452, %v459
  %v462 = vmul.f32 %v460, 1.442695
  %v463 = vpow.pop %v462
  %v464 = vmul.f32 %v461, 1.442695
  %v465 = vpow.pop %v464
  %v466 = vsel %vm187, %v463, 0.0
  %467 = vadd.xlane.f32.xlu0 %v466
  %v468 = vpop.xlane.xlu0 %467
  %v469 = vsel %vm187, %v465, 0.0
  %470 = vadd.xlane.f32.xlu0 %v469
  %v471 = vpop.xlane.xlu0 %470
  %v472 = vrcp.pop %v468
  %v473 = vrcp.pop %v471
  %v474 = vmul.f32 %v463, %v472
  %v475 = vmul.f32 %v465, %v473
  %v477 = vsel %vm187, %v474, 0
  %479 = vmatpush.msra.mxu0 0.0
  %480 = vmatpush.msra.mxu0 0.0
  %481 = vmatpush.msra.mxu0 0.0
  %482 = vmatpush.msra.mxu0 0.0
  %483 = vmatpush.msra.mxu0 0.0
  %484 = vmatpush.msra.mxu0 0.0
  %485 = vmatpush.msra.mxu0 0.0
  %486 = vmatpush.msra.mxu0 0.0
  %487 = vmatpush.msra.mxu0 0.0
  %488 = vmatpush.msra.mxu0 0.0
  %489 = vmatpush.msra.mxu0 0.0
  %490 = vmatpush.msra.mxu0 0.0
  %491 = vmatpush.msra.mxu0 0.0
  %492 = vmatpush.msra.mxu0 0.0
  %493 = vmatpush.msra.mxu0 0.0
  %494 = vmatpush.msra.mxu0 %v397
  %495 = vmatmul.f32.gmra.mxu0 %v477
  %v496 = vpop.f32.mrf.mxu0
  %v497 = vadd.f32 0.0, %v496
  %498 = vdwg.mxu0
  %v500 = vsel %vm187, %v475, 0
  %502 = vmatpush.msra.mxu0 0.0
  %503 = vmatpush.msra.mxu0 0.0
  %504 = vmatpush.msra.mxu0 0.0
  %505 = vmatpush.msra.mxu0 0.0
  %506 = vmatpush.msra.mxu0 0.0
  %507 = vmatpush.msra.mxu0 0.0
  %508 = vmatpush.msra.mxu0 0.0
  %509 = vmatpush.msra.mxu0 0.0
  %510 = vmatpush.msra.mxu0 0.0
  %511 = vmatpush.msra.mxu0 0.0
  %512 = vmatpush.msra.mxu0 0.0
  %513 = vmatpush.msra.mxu0 0.0
  %514 = vmatpush.msra.mxu0 0.0
  %515 = vmatpush.msra.mxu0 0.0
  %516 = vmatpush.msra.mxu0 0.0
  %517 = vmatpush.msra.mxu0 %v400
  %518 = vmatmul.f32.gmra.mxu0 %v500
  %v519 = vpop.f32.mrf.mxu0
  %v520 = vadd.f32 0.0, %v519
  %521 = vdwg.mxu0
  %s522 = scalar_lea.vmem %s6, 8
  %v523 = vld [vmem:[%s522] sm:$0xff]
  %v525 = vsel %vm187, %v497, 0
  %v528 = vsel %vm187, %v520, 0
  %530 = vmatpush.msra.mxu0 0.0
  %531 = vmatpush.msra.mxu0 0.0
  %532 = vmatpush.msra.mxu0 0.0
  %533 = vmatpush.msra.mxu0 0.0
  %534 = vmatpush.msra.mxu0 0.0
  %535 = vmatpush.msra.mxu0 0.0
  %536 = vmatpush.msra.mxu0 0.0
  %537 = vmatpush.msra.mxu0 0.0
  %538 = vmatpush.msra.mxu0 0.0
  %539 = vmatpush.msra.mxu0 0.0
  %540 = vmatpush.msra.mxu0 0.0
  %541 = vmatpush.msra.mxu0 0.0
  %542 = vmatpush.msra.mxu0 0.0
  %543 = vmatpush.msra.mxu0 0.0
  %544 = vmatpush.msra.mxu0 0.0
  %545 = vmatpush.msra.mxu0 %v523
  %546 = vmatmul.f32.gmra.mxu0 %v525
  %v547 = vpop.f32.mrf.mxu0
  %v548 = vadd.f32 0.0, %v547
  %549 = vmatmul.f32.gmra.mxu0 %v528
  %v550 = vpop.f32.mrf.mxu0
  %v551 = vadd.f32 0.0, %v550
  %552 = vdwg.mxu0
  %v554 = vsel %vm187, %v283, 0
  %v557 = vsel %vm187, %v306, 0
  %559 = vmatpush.msra.mxu0 0.0
  %560 = vmatpush.msra.mxu0 0.0
  %561 = vmatpush.msra.mxu0 0.0
  %562 = vmatpush.msra.mxu0 0.0
  %563 = vmatpush.msra.mxu0 0.0
  %564 = vmatpush.msra.mxu0 0.0
  %565 = vmatpush.msra.mxu0 0.0
  %566 = vmatpush.msra.mxu0 0.0
  %567 = vmatpush.msra.mxu0 0.0
  %568 = vmatpush.msra.mxu0 0.0
  %569 = vmatpush.msra.mxu0 0.0
  %570 = vmatpush.msra.mxu0 0.0
  %571 = vmatpush.msra.mxu0 0.0
  %572 = vmatpush.msra.mxu0 0.0
  %573 = vmatpush.msra.mxu0 0.0
  %574 = vmatpush.msra.mxu0 %v308
  %575 = vmatmul.f32.gmra.mxu0 %v554
  %v576 = vpop.f32.mrf.mxu0
  %v577 = vadd.f32 %v548, %v576
  %578 = vmatmul.f32.gmra.mxu0 %v557
  %v579 = vpop.f32.mrf.mxu0
  %v580 = vadd.f32 %v551, %v579
  %581 = vdwg.mxu0
  %v582 = vld [vmem:[%s7] sm:$0x1]
  %v584 = vperm.slane %v582, 0
  %v586 = vadd.f32 %v577, %v584
  %v587 = vadd.f32 %v580, %v584
  %v588 = vadd.f32 %v87, %v586
  %v589 = vadd.f32 %v88, %v587
  %s590 = scalar_lea.vmem %s7, 1
  %v591 = vld [vmem:[%s590] sm:$0x1]
  %s592 = scalar_lea.vmem %s7, 2
  %v593 = vld [vmem:[%s592] sm:$0x1]
  %v594 = vsel %vm95, %v588, 0.0
  %595 = vadd.xlane.f32.xlu0 %v594
  %v596 = vpop.xlane.xlu0 %595
  %v597 = vsel %vm95, %v589, 0.0
  %598 = vadd.xlane.f32.xlu0 %v597
  %v599 = vpop.xlane.xlu0 %598
  %v600 = vrcp.pop 16.0
  %v601 = vmul.f32 16.0, %v600
  %v602 = vsub.f32 1.0, %v601
  %v603 = vmul.f32 %v600, %v602
  %v604 = vadd.f32 %v600, %v603
  %vm605 = vweird.f32 %v600
  %v606 = vsel %vm605, %v600, %v604
  %v607 = vmul.f32 %v596, %v606
  %v608 = vmul.f32 %v599, %v606
  %v609 = vsub.f32 %v588, %v607
  %v610 = vsub.f32 %v589, %v608
  %v611 = vmul.f32 %v609, %v609
  %v612 = vmul.f32 %v610, %v610
  %v613 = vsel %vm95, %v611, 0.0
  %614 = vadd.xlane.f32.xlu0 %v613
  %v615 = vpop.xlane.xlu0 %614
  %v616 = vsel %vm95, %v612, 0.0
  %617 = vadd.xlane.f32.xlu0 %v616
  %v618 = vpop.xlane.xlu0 %617
  %v619 = vmul.f32 %v615, %v606
  %v620 = vmul.f32 %v618, %v606
  %v621 = vadd.f32 %v619, 1e-05
  %v622 = vadd.f32 %v620, 1e-05
  %v623 = vrsqrt.pop %v621
  %v624 = vmul.f32 %v623, %v621
  %v625 = vmul.f32 %v624, %v623
  %v626 = vmul.f32 0.5, %v625
  %v627 = vsub.f32 1.5, %v626
  %v628 = vmul.f32 %v623, %v627
  %vm629 = vweird.f32 %v621
  %vm630 = vweird.f32 %v623
  %vm631 = vmor %vm629, %vm630
  %v632 = vsel %vm631, %v623, %v628
  %v633 = vrsqrt.pop %v622
  %v634 = vmul.f32 %v633, %v622
  %v635 = vmul.f32 %v634, %v633
  %v636 = vmul.f32 0.5, %v635
  %v637 = vsub.f32 1.5, %v636
  %v638 = vmul.f32 %v633, %v637
  %vm639 = vweird.f32 %v622
  %vm640 = vweird.f32 %v633
  %vm641 = vmor %vm639, %vm640
  %v642 = vsel %vm641, %v633, %v638
  %v643 = vmul.f32 %v609, %v632
  %v644 = vmul.f32 %v610, %v642
  %v646 = vperm.slane %v591, 0
  %v648 = vmul.f32 %v643, %v646
  %v649 = vmul.f32 %v644, %v646
  %v651 = vperm.slane %v593, 0
  %v653 = vadd.f32 %v648, %v651
  %v654 = vadd.f32 %v649, %v651
  %v655 = vld [vmem:[%s8] sm:$0xff]
  %v656 = vld [vmem:[%s8 + $0x8] sm:$0xff]
  %v657 = vld [vmem:[%s9] sm:$0x1]
  %v659 = vperm.slane %v657, 0
  %v662 = vsel %vm95, %v653, 0
  %v665 = vsel %vm95, %v654, 0
  %667 = vmatpush.msra.mxu0 0.0
  %668 = vmatpush.msra.mxu0 0.0
  %669 = vmatpush.msra.mxu0 0.0
  %670 = vmatpush.msra.mxu0 0.0
  %671 = vmatpush.msra.mxu0 0.0
  %672 = vmatpush.msra.mxu0 0.0
  %673 = vmatpush.msra.mxu0 0.0
  %674 = vmatpush.msra.mxu0 0.0
  %675 = vmatpush.msra.mxu0 0.0
  %676 = vmatpush.msra.mxu0 0.0
  %677 = vmatpush.msra.mxu0 0.0
  %678 = vmatpush.msra.mxu0 0.0
  %679 = vmatpush.msra.mxu0 0.0
  %680 = vmatpush.msra.mxu0 0.0
  %681 = vmatpush.msra.mxu0 %v656
  %682 = vmatpush.msra.mxu0 %v655
  %683 = vmatmul.f32.gmra.mxu0 %v662
  %v684 = vpop.f32.mrf.mxu0
  %v685 = vadd.f32 %v659, %v684
  %686 = vmatmul.f32.gmra.mxu0 %v665
  %v687 = vpop.f32.mrf.mxu0
  %v688 = vadd.f32 %v659, %v687
  %689 = vdwg.mxu0
  %v690 = vmax.f32 %v685, 0.0
  %v691 = vmax.f32 %v688, 0.0
  %v692 = vld [vmem:[%s10] sm:$0xff]
  %v693 = vld [vmem:[%s10 + $0x8] sm:$0xff]
  %s694 = scalar_lea.vmem %s7, 5
  %v695 = vld [vmem:[%s694] sm:$0x1]
  %v697 = vperm.slane %v695, 0
  %v700 = vsel %vm95, %v690, 0
  %v703 = vsel %vm95, %v691, 0
  %705 = vmatpush.msra.mxu0 0.0
  %706 = vmatpush.msra.mxu0 0.0
  %707 = vmatpush.msra.mxu0 0.0
  %708 = vmatpush.msra.mxu0 0.0
  %709 = vmatpush.msra.mxu0 0.0
  %710 = vmatpush.msra.mxu0 0.0
  %711 = vmatpush.msra.mxu0 0.0
  %712 = vmatpush.msra.mxu0 0.0
  %713 = vmatpush.msra.mxu0 0.0
  %714 = vmatpush.msra.mxu0 0.0
  %715 = vmatpush.msra.mxu0 0.0
  %716 = vmatpush.msra.mxu0 0.0
  %717 = vmatpush.msra.mxu0 0.0
  %718 = vmatpush.msra.mxu0 0.0
  %719 = vmatpush.msra.mxu0 %v693
  %720 = vmatpush.msra.mxu0 %v692
  %721 = vmatmul.f32.gmra.mxu0 %v700
  %v722 = vpop.f32.mrf.mxu0
  %v723 = vadd.f32 %v697, %v722
  %724 = vmatmul.f32.gmra.mxu0 %v703
  %v725 = vpop.f32.mrf.mxu0
  %v726 = vadd.f32 %v697, %v725
  %727 = vdwg.mxu0
  %v728 = vadd.f32 %v653, %v723
  %v729 = vadd.f32 %v654, %v726
  %s730 = scalar_lea.vmem %s7, 3
  %v731 = vld [vmem:[%s730] sm:$0x1]
  %s732 = scalar_lea.vmem %s7, 4
  %v733 = vld [vmem:[%s732] sm:$0x1]
  %v734 = vsel %vm95, %v728, 0.0
  %735 = vadd.xlane.f32.xlu0 %v734
  %v736 = vpop.xlane.xlu0 %735
  %v737 = vsel %vm95, %v729, 0.0
  %738 = vadd.xlane.f32.xlu0 %v737
  %v739 = vpop.xlane.xlu0 %738
  %v740 = vmul.f32 %v736, %v606
  %v741 = vmul.f32 %v739, %v606
  %v742 = vsub.f32 %v728, %v740
  %v743 = vsub.f32 %v729, %v741
  %v744 = vmul.f32 %v742, %v742
  %v745 = vmul.f32 %v743, %v743
  %v746 = vsel %vm95, %v744, 0.0
  %747 = vadd.xlane.f32.xlu0 %v746
  %v748 = vpop.xlane.xlu0 %747
  %v749 = vsel %vm95, %v745, 0.0
  %750 = vadd.xlane.f32.xlu0 %v749
  %v751 = vpop.xlane.xlu0 %750
  %v752 = vmul.f32 %v748, %v606
  %v753 = vmul.f32 %v751, %v606
  %v754 = vadd.f32 %v752, 1e-05
  %v755 = vadd.f32 %v753, 1e-05
  %v756 = vrsqrt.pop %v754
  %v757 = vmul.f32 %v756, %v754
  %v758 = vmul.f32 %v757, %v756
  %v759 = vmul.f32 0.5, %v758
  %v760 = vsub.f32 1.5, %v759
  %v761 = vmul.f32 %v756, %v760
  %vm762 = vweird.f32 %v754
  %vm763 = vweird.f32 %v756
  %vm764 = vmor %vm762, %vm763
  %v765 = vsel %vm764, %v756, %v761
  %v766 = vrsqrt.pop %v755
  %v767 = vmul.f32 %v766, %v755
  %v768 = vmul.f32 %v767, %v766
  %v769 = vmul.f32 0.5, %v768
  %v770 = vsub.f32 1.5, %v769
  %v771 = vmul.f32 %v766, %v770
  %vm772 = vweird.f32 %v755
  %vm773 = vweird.f32 %v766
  %vm774 = vmor %vm772, %vm773
  %v775 = vsel %vm774, %v766, %v771
  %v776 = vmul.f32 %v742, %v765
  %v777 = vmul.f32 %v743, %v775
  %v779 = vperm.slane %v731, 0
  %v781 = vmul.f32 %v776, %v779
  %v782 = vmul.f32 %v777, %v779
  %v784 = vperm.slane %v733, 0
  %v786 = vadd.f32 %v781, %v784
  %v787 = vadd.f32 %v782, %v784
  %s788 = scalar_lea.vmem %s4, 96
  %v789 = vld [vmem:[%s788] sm:$0xff]
  %v790 = vld [vmem:[%s788 + $0x8] sm:$0xff]
  %s791 = scalar_lea.vmem %s5, 6
  %v792 = vld [vmem:[%s791] sm:$0x1]
  %v794 = vperm.slane %v792, 0
  %v797 = vsel %vm95, %v786, 0
  %v800 = vsel %vm95, %v787, 0
  %802 = vmatpush.msra.mxu0 0.0
  %803 = vmatpush.msra.mxu0 0.0
  %804 = vmatpush.msra.mxu0 0.0
  %805 = vmatpush.msra.mxu0 0.0
  %806 = vmatpush.msra.mxu0 0.0
  %807 = vmatpush.msra.mxu0 0.0
  %808 = vmatpush.msra.mxu0 0.0
  %809 = vmatpush.msra.mxu0 0.0
  %810 = vmatpush.msra.mxu0 0.0
  %811 = vmatpush.msra.mxu0 0.0
  %812 = vmatpush.msra.mxu0 0.0
  %813 = vmatpush.msra.mxu0 0.0
  %814 = vmatpush.msra.mxu0 0.0
  %815 = vmatpush.msra.mxu0 0.0
  %816 = vmatpush.msra.mxu0 %v790
  %817 = vmatpush.msra.mxu0 %v789
  %818 = vmatmul.f32.gmra.mxu0 %v797
  %v819 = vpop.f32.mrf.mxu0
  %v820 = vadd.f32 %v794, %v819
  %821 = vmatmul.f32.gmra.mxu0 %v800
  %v822 = vpop.f32.mrf.mxu0
  %v823 = vadd.f32 %v794, %v822
  %824 = vdwg.mxu0
  %s825 = scalar_lea.vmem %s4, 128
  %v826 = vld [vmem:[%s825] sm:$0xff]
  %v827 = vld [vmem:[%s825 + $0x8] sm:$0xff]
  %s828 = scalar_lea.vmem %s5, 8
  %v829 = vld [vmem:[%s828] sm:$0x1]
  %v831 = vperm.slane %v829, 0
  %833 = vmatpush.msra.mxu0 0.0
  %834 = vmatpush.msra.mxu0 0.0
  %835 = vmatpush.msra.mxu0 0.0
  %836 = vmatpush.msra.mxu0 0.0
  %837 = vmatpush.msra.mxu0 0.0
  %838 = vmatpush.msra.mxu0 0.0
  %839 = vmatpush.msra.mxu0 0.0
  %840 = vmatpush.msra.mxu0 0.0
  %841 = vmatpush.msra.mxu0 0.0
  %842 = vmatpush.msra.mxu0 0.0
  %843 = vmatpush.msra.mxu0 0.0
  %844 = vmatpush.msra.mxu0 0.0
  %845 = vmatpush.msra.mxu0 0.0
  %846 = vmatpush.msra.mxu0 0.0
  %847 = vmatpush.msra.mxu0 %v827
  %848 = vmatpush.msra.mxu0 %v826
  %849 = vmatmul.f32.gmra.mxu0 %v797
  %v850 = vpop.f32.mrf.mxu0
  %v851 = vadd.f32 %v831, %v850
  %852 = vmatmul.f32.gmra.mxu0 %v800
  %v853 = vpop.f32.mrf.mxu0
  %v854 = vadd.f32 %v831, %v853
  %855 = vdwg.mxu0
  %s856 = scalar_lea.vmem %s4, 160
  %v857 = vld [vmem:[%s856] sm:$0xff]
  %v858 = vld [vmem:[%s856 + $0x8] sm:$0xff]
  %s859 = scalar_lea.vmem %s5, 10
  %v860 = vld [vmem:[%s859] sm:$0x1]
  %v862 = vperm.slane %v860, 0
  %864 = vmatpush.msra.mxu0 0.0
  %865 = vmatpush.msra.mxu0 0.0
  %866 = vmatpush.msra.mxu0 0.0
  %867 = vmatpush.msra.mxu0 0.0
  %868 = vmatpush.msra.mxu0 0.0
  %869 = vmatpush.msra.mxu0 0.0
  %870 = vmatpush.msra.mxu0 0.0
  %871 = vmatpush.msra.mxu0 0.0
  %872 = vmatpush.msra.mxu0 0.0
  %873 = vmatpush.msra.mxu0 0.0
  %874 = vmatpush.msra.mxu0 0.0
  %875 = vmatpush.msra.mxu0 0.0
  %876 = vmatpush.msra.mxu0 0.0
  %877 = vmatpush.msra.mxu0 0.0
  %878 = vmatpush.msra.mxu0 %v858
  %879 = vmatpush.msra.mxu0 %v857
  %880 = vmatmul.f32.gmra.mxu0 %v797
  %v881 = vpop.f32.mrf.mxu0
  %v882 = vadd.f32 %v862, %v881
  %883 = vmatmul.f32.gmra.mxu0 %v800
  %v884 = vpop.f32.mrf.mxu0
  %v885 = vadd.f32 %v862, %v884
  %886 = vdwg.mxu0
  %v888 = vsel %vm187, %v820, 0
  %v891 = vsel %vm187, %v851, 0
  %893 = vmatpush.xpose.msra.mxu0 0.0
  %894 = vmatpush.xpose.msra.mxu0 0.0
  %895 = vmatpush.xpose.msra.mxu0 0.0
  %896 = vmatpush.xpose.msra.mxu0 0.0
  %897 = vmatpush.xpose.msra.mxu0 0.0
  %898 = vmatpush.xpose.msra.mxu0 0.0
  %899 = vmatpush.xpose.msra.mxu0 0.0
  %900 = vmatpush.xpose.msra.mxu0 0.0
  %901 = vmatpush.xpose.msra.mxu0 0.0
  %902 = vmatpush.xpose.msra.mxu0 0.0
  %903 = vmatpush.xpose.msra.mxu0 0.0
  %904 = vmatpush.xpose.msra.mxu0 0.0
  %905 = vmatpush.xpose.msra.mxu0 0.0
  %906 = vmatpush.xpose.msra.mxu0 0.0
  %907 = vmatpush.xpose.msra.mxu0 0.0
  %908 = vmatpush.xpose.msra.mxu0 %v891
  %909 = vmatmul.f32.gmra.mxu0 %v888
  %v910 = vpop.f32.mrf.mxu0
  %v911 = vadd.f32 0.0, %v910
  %912 = vdwg.mxu0
  %v914 = vsel %vm187, %v823, 0
  %v917 = vsel %vm187, %v854, 0
  %919 = vmatpush.xpose.msra.mxu0 0.0
  %920 = vmatpush.xpose.msra.mxu0 0.0
  %921 = vmatpush.xpose.msra.mxu0 0.0
  %922 = vmatpush.xpose.msra.mxu0 0.0
  %923 = vmatpush.xpose.msra.mxu0 0.0
  %924 = vmatpush.xpose.msra.mxu0 0.0
  %925 = vmatpush.xpose.msra.mxu0 0.0
  %926 = vmatpush.xpose.msra.mxu0 0.0
  %927 = vmatpush.xpose.msra.mxu0 0.0
  %928 = vmatpush.xpose.msra.mxu0 0.0
  %929 = vmatpush.xpose.msra.mxu0 0.0
  %930 = vmatpush.xpose.msra.mxu0 0.0
  %931 = vmatpush.xpose.msra.mxu0 0.0
  %932 = vmatpush.xpose.msra.mxu0 0.0
  %933 = vmatpush.xpose.msra.mxu0 0.0
  %934 = vmatpush.xpose.msra.mxu0 %v917
  %935 = vmatmul.f32.gmra.mxu0 %v914
  %v936 = vpop.f32.mrf.mxu0
  %v937 = vadd.f32 0.0, %v936
  %938 = vdwg.mxu0
  %v939 = vsel %vm187, %v911, -inf
  %940 = vmax.xlane.f32.xlu0 %v939
  %v941 = vpop.xlane.xlu0 %940
  %v942 = vsel %vm187, %v937, -inf
  %943 = vmax.xlane.f32.xlu0 %v942
  %v944 = vpop.xlane.xlu0 %943
  %v945 = vsub.f32 %v911, %v941
  %v946 = vsub.f32 %v937, %v944
  %v947 = vmul.f32 %v945, 1.442695
  %v948 = vpow.pop %v947
  %v949 = vmul.f32 %v946, 1.442695
  %v950 = vpow.pop %v949
  %v951 = vsel %vm187, %v948, 0.0
  %952 = vadd.xlane.f32.xlu0 %v951
  %v953 = vpop.xlane.xlu0 %952
  %v954 = vsel %vm187, %v950, 0.0
  %955 = vadd.xlane.f32.xlu0 %v954
  %v956 = vpop.xlane.xlu0 %955
  %v957 = vrcp.pop %v953
  %v958 = vrcp.pop %v956
  %v959 = vmul.f32 %v948, %v957
  %v960 = vmul.f32 %v950, %v958
  %v962 = vsel %vm187, %v959, 0
  %964 = vmatpush.msra.mxu0 0.0
  %965 = vmatpush.msra.mxu0 0.0
  %966 = vmatpush.msra.mxu0 0.0
  %967 = vmatpush.msra.mxu0 0.0
  %968 = vmatpush.msra.mxu0 0.0
  %969 = vmatpush.msra.mxu0 0.0
  %970 = vmatpush.msra.mxu0 0.0
  %971 = vmatpush.msra.mxu0 0.0
  %972 = vmatpush.msra.mxu0 0.0
  %973 = vmatpush.msra.mxu0 0.0
  %974 = vmatpush.msra.mxu0 0.0
  %975 = vmatpush.msra.mxu0 0.0
  %976 = vmatpush.msra.mxu0 0.0
  %977 = vmatpush.msra.mxu0 0.0
  %978 = vmatpush.msra.mxu0 0.0
  %979 = vmatpush.msra.mxu0 %v882
  %980 = vmatmul.f32.gmra.mxu0 %v962
  %v981 = vpop.f32.mrf.mxu0
  %v982 = vadd.f32 0.0, %v981
  %983 = vdwg.mxu0
  %v985 = vsel %vm187, %v960, 0
  %987 = vmatpush.msra.mxu0 0.0
  %988 = vmatpush.msra.mxu0 0.0
  %989 = vmatpush.msra.mxu0 0.0
  %990 = vmatpush.msra.mxu0 0.0
  %991 = vmatpush.msra.mxu0 0.0
  %992 = vmatpush.msra.mxu0 0.0
  %993 = vmatpush.msra.mxu0 0.0
  %994 = vmatpush.msra.mxu0 0.0
  %995 = vmatpush.msra.mxu0 0.0
  %996 = vmatpush.msra.mxu0 0.0
  %997 = vmatpush.msra.mxu0 0.0
  %998 = vmatpush.msra.mxu0 0.0
  %999 = vmatpush.msra.mxu0 0.0
  %1000 = vmatpush.msra.mxu0 0.0
  %1001 = vmatpush.msra.mxu0 0.0
  %1002 = vmatpush.msra.mxu0 %v885
  %1003 = vmatmul.f32.gmra.mxu0 %v985
  %v1004 = vpop.f32.mrf.mxu0
  %v1005 = vadd.f32 0.0, %v1004
  %1006 = vdwg.mxu0
  %s1007 = scalar_lea.vmem %s6, 16
  %v1008 = vld [vmem:[%s1007] sm:$0xff]
  %s1009 = scalar_lea.vmem %s4, 112
  %v1010 = vld [vmem:[%s1009] sm:$0xff]
  %v1011 = vld [vmem:[%s1009 + $0x8] sm:$0xff]
  %s1012 = scalar_lea.vmem %s5, 7
  %v1013 = vld [vmem:[%s1012] sm:$0x1]
  %v1015 = vperm.slane %v1013, 0
  %1017 = vmatpush.msra.mxu0 0.0
  %1018 = vmatpush.msra.mxu0 0.0
  %1019 = vmatpush.msra.mxu0 0.0
  %1020 = vmatpush.msra.mxu0 0.0
  %1021 = vmatpush.msra.mxu0 0.0
  %1022 = vmatpush.msra.mxu0 0.0
  %1023 = vmatpush.msra.mxu0 0.0
  %1024 = vmatpush.msra.mxu0 0.0
  %1025 = vmatpush.msra.mxu0 0.0
  %1026 = vmatpush.msra.mxu0 0.0
  %1027 = vmatpush.msra.mxu0 0.0
  %1028 = vmatpush.msra.mxu0 0.0
  %1029 = vmatpush.msra.mxu0 0.0
  %1030 = vmatpush.msra.mxu0 0.0
  %1031 = vmatpush.msra.mxu0 %v1011
  %1032 = vmatpush.msra.mxu0 %v1010
  %1033 = vmatmul.f32.gmra.mxu0 %v797
  %v1034 = vpop.f32.mrf.mxu0
  %v1035 = vadd.f32 %v1015, %v1034
  %1036 = vmatmul.f32.gmra.mxu0 %v800
  %v1037 = vpop.f32.mrf.mxu0
  %v1038 = vadd.f32 %v1015, %v1037
  %1039 = vdwg.mxu0
  %s1040 = scalar_lea.vmem %s4, 144
  %v1041 = vld [vmem:[%s1040] sm:$0xff]
  %v1042 = vld [vmem:[%s1040 + $0x8] sm:$0xff]
  %s1043 = scalar_lea.vmem %s5, 9
  %v1044 = vld [vmem:[%s1043] sm:$0x1]
  %v1046 = vperm.slane %v1044, 0
  %1048 = vmatpush.msra.mxu0 0.0
  %1049 = vmatpush.msra.mxu0 0.0
  %1050 = vmatpush.msra.mxu0 0.0
  %1051 = vmatpush.msra.mxu0 0.0
  %1052 = vmatpush.msra.mxu0 0.0
  %1053 = vmatpush.msra.mxu0 0.0
  %1054 = vmatpush.msra.mxu0 0.0
  %1055 = vmatpush.msra.mxu0 0.0
  %1056 = vmatpush.msra.mxu0 0.0
  %1057 = vmatpush.msra.mxu0 0.0
  %1058 = vmatpush.msra.mxu0 0.0
  %1059 = vmatpush.msra.mxu0 0.0
  %1060 = vmatpush.msra.mxu0 0.0
  %1061 = vmatpush.msra.mxu0 0.0
  %1062 = vmatpush.msra.mxu0 %v1042
  %1063 = vmatpush.msra.mxu0 %v1041
  %1064 = vmatmul.f32.gmra.mxu0 %v797
  %v1065 = vpop.f32.mrf.mxu0
  %v1066 = vadd.f32 %v1046, %v1065
  %1067 = vmatmul.f32.gmra.mxu0 %v800
  %v1068 = vpop.f32.mrf.mxu0
  %v1069 = vadd.f32 %v1046, %v1068
  %1070 = vdwg.mxu0
  %s1071 = scalar_lea.vmem %s4, 176
  %v1072 = vld [vmem:[%s1071] sm:$0xff]
  %v1073 = vld [vmem:[%s1071 + $0x8] sm:$0xff]
  %s1074 = scalar_lea.vmem %s5, 11
  %v1075 = vld [vmem:[%s1074] sm:$0x1]
  %v1077 = vperm.slane %v1075, 0
  %1079 = vmatpush.msra.mxu0 0.0
  %1080 = vmatpush.msra.mxu0 0.0
  %1081 = vmatpush.msra.mxu0 0.0
  %1082 = vmatpush.msra.mxu0 0.0
  %1083 = vmatpush.msra.mxu0 0.0
  %1084 = vmatpush.msra.mxu0 0.0
  %1085 = vmatpush.msra.mxu0 0.0
  %1086 = vmatpush.msra.mxu0 0.0
  %1087 = vmatpush.msra.mxu0 0.0
  %1088 = vmatpush.msra.mxu0 0.0
  %1089 = vmatpush.msra.mxu0 0.0
  %1090 = vmatpush.msra.mxu0 0.0
  %1091 = vmatpush.msra.mxu0 0.0
  %1092 = vmatpush.msra.mxu0 0.0
  %1093 = vmatpush.msra.mxu0 %v1073
  %1094 = vmatpush.msra.mxu0 %v1072
  %1095 = vmatmul.f32.gmra.mxu0 %v797
  %v1096 = vpop.f32.mrf.mxu0
  %v1097 = vadd.f32 %v1077, %v1096
  %1098 = vmatmul.f32.gmra.mxu0 %v800
  %v1099 = vpop.f32.mrf.mxu0
  %v1100 = vadd.f32 %v1077, %v1099
  %1101 = vdwg.mxu0
  %v1103 = vsel %vm187, %v1035, 0
  %v1106 = vsel %vm187, %v1066, 0
  %1108 = vmatpush.xpose.msra.mxu0 0.0
  %1109 = vmatpush.xpose.msra.mxu0 0.0
  %1110 = vmatpush.xpose.msra.mxu0 0.0
  %1111 = vmatpush.xpose.msra.mxu0 0.0
  %1112 = vmatpush.xpose.msra.mxu0 0.0
  %1113 = vmatpush.xpose.msra.mxu0 0.0
  %1114 = vmatpush.xpose.msra.mxu0 0.0
  %1115 = vmatpush.xpose.msra.mxu0 0.0
  %1116 = vmatpush.xpose.msra.mxu0 0.0
  %1117 = vmatpush.xpose.msra.mxu0 0.0
  %1118 = vmatpush.xpose.msra.mxu0 0.0
  %1119 = vmatpush.xpose.msra.mxu0 0.0
  %1120 = vmatpush.xpose.msra.mxu0 0.0
  %1121 = vmatpush.xpose.msra.mxu0 0.0
  %1122 = vmatpush.xpose.msra.mxu0 0.0
  %1123 = vmatpush.xpose.msra.mxu0 %v1106
  %1124 = vmatmul.f32.gmra.mxu0 %v1103
  %v1125 = vpop.f32.mrf.mxu0
  %v1126 = vadd.f32 0.0, %v1125
  %1127 = vdwg.mxu0
  %v1129 = vsel %vm187, %v1038, 0
  %v1132 = vsel %vm187, %v1069, 0
  %1134 = vmatpush.xpose.msra.mxu0 0.0
  %1135 = vmatpush.xpose.msra.mxu0 0.0
  %1136 = vmatpush.xpose.msra.mxu0 0.0
  %1137 = vmatpush.xpose.msra.mxu0 0.0
  %1138 = vmatpush.xpose.msra.mxu0 0.0
  %1139 = vmatpush.xpose.msra.mxu0 0.0
  %1140 = vmatpush.xpose.msra.mxu0 0.0
  %1141 = vmatpush.xpose.msra.mxu0 0.0
  %1142 = vmatpush.xpose.msra.mxu0 0.0
  %1143 = vmatpush.xpose.msra.mxu0 0.0
  %1144 = vmatpush.xpose.msra.mxu0 0.0
  %1145 = vmatpush.xpose.msra.mxu0 0.0
  %1146 = vmatpush.xpose.msra.mxu0 0.0
  %1147 = vmatpush.xpose.msra.mxu0 0.0
  %1148 = vmatpush.xpose.msra.mxu0 0.0
  %1149 = vmatpush.xpose.msra.mxu0 %v1132
  %1150 = vmatmul.f32.gmra.mxu0 %v1129
  %v1151 = vpop.f32.mrf.mxu0
  %v1152 = vadd.f32 0.0, %v1151
  %1153 = vdwg.mxu0
  %v1154 = vsel %vm187, %v1126, -inf
  %1155 = vmax.xlane.f32.xlu0 %v1154
  %v1156 = vpop.xlane.xlu0 %1155
  %v1157 = vsel %vm187, %v1152, -inf
  %1158 = vmax.xlane.f32.xlu0 %v1157
  %v1159 = vpop.xlane.xlu0 %1158
  %v1160 = vsub.f32 %v1126, %v1156
  %v1161 = vsub.f32 %v1152, %v1159
  %v1162 = vmul.f32 %v1160, 1.442695
  %v1163 = vpow.pop %v1162
  %v1164 = vmul.f32 %v1161, 1.442695
  %v1165 = vpow.pop %v1164
  %v1166 = vsel %vm187, %v1163, 0.0
  %1167 = vadd.xlane.f32.xlu0 %v1166
  %v1168 = vpop.xlane.xlu0 %1167
  %v1169 = vsel %vm187, %v1165, 0.0
  %1170 = vadd.xlane.f32.xlu0 %v1169
  %v1171 = vpop.xlane.xlu0 %1170
  %v1172 = vrcp.pop %v1168
  %v1173 = vrcp.pop %v1171
  %v1174 = vmul.f32 %v1163, %v1172
  %v1175 = vmul.f32 %v1165, %v1173
  %v1177 = vsel %vm187, %v1174, 0
  %1179 = vmatpush.msra.mxu0 0.0
  %1180 = vmatpush.msra.mxu0 0.0
  %1181 = vmatpush.msra.mxu0 0.0
  %1182 = vmatpush.msra.mxu0 0.0
  %1183 = vmatpush.msra.mxu0 0.0
  %1184 = vmatpush.msra.mxu0 0.0
  %1185 = vmatpush.msra.mxu0 0.0
  %1186 = vmatpush.msra.mxu0 0.0
  %1187 = vmatpush.msra.mxu0 0.0
  %1188 = vmatpush.msra.mxu0 0.0
  %1189 = vmatpush.msra.mxu0 0.0
  %1190 = vmatpush.msra.mxu0 0.0
  %1191 = vmatpush.msra.mxu0 0.0
  %1192 = vmatpush.msra.mxu0 0.0
  %1193 = vmatpush.msra.mxu0 0.0
  %1194 = vmatpush.msra.mxu0 %v1097
  %1195 = vmatmul.f32.gmra.mxu0 %v1177
  %v1196 = vpop.f32.mrf.mxu0
  %v1197 = vadd.f32 0.0, %v1196
  %1198 = vdwg.mxu0
  %v1200 = vsel %vm187, %v1175, 0
  %1202 = vmatpush.msra.mxu0 0.0
  %1203 = vmatpush.msra.mxu0 0.0
  %1204 = vmatpush.msra.mxu0 0.0
  %1205 = vmatpush.msra.mxu0 0.0
  %1206 = vmatpush.msra.mxu0 0.0
  %1207 = vmatpush.msra.mxu0 0.0
  %1208 = vmatpush.msra.mxu0 0.0
  %1209 = vmatpush.msra.mxu0 0.0
  %1210 = vmatpush.msra.mxu0 0.0
  %1211 = vmatpush.msra.mxu0 0.0
  %1212 = vmatpush.msra.mxu0 0.0
  %1213 = vmatpush.msra.mxu0 0.0
  %1214 = vmatpush.msra.mxu0 0.0
  %1215 = vmatpush.msra.mxu0 0.0
  %1216 = vmatpush.msra.mxu0 0.0
  %1217 = vmatpush.msra.mxu0 %v1100
  %1218 = vmatmul.f32.gmra.mxu0 %v1200
  %v1219 = vpop.f32.mrf.mxu0
  %v1220 = vadd.f32 0.0, %v1219
  %1221 = vdwg.mxu0
  %s1222 = scalar_lea.vmem %s6, 24
  %v1223 = vld [vmem:[%s1222] sm:$0xff]
  %v1225 = vsel %vm187, %v1197, 0
  %v1228 = vsel %vm187, %v1220, 0
  %1230 = vmatpush.msra.mxu0 0.0
  %1231 = vmatpush.msra.mxu0 0.0
  %1232 = vmatpush.msra.mxu0 0.0
  %1233 = vmatpush.msra.mxu0 0.0
  %1234 = vmatpush.msra.mxu0 0.0
  %1235 = vmatpush.msra.mxu0 0.0
  %1236 = vmatpush.msra.mxu0 0.0
  %1237 = vmatpush.msra.mxu0 0.0
  %1238 = vmatpush.msra.mxu0 0.0
  %1239 = vmatpush.msra.mxu0 0.0
  %1240 = vmatpush.msra.mxu0 0.0
  %1241 = vmatpush.msra.mxu0 0.0
  %1242 = vmatpush.msra.mxu0 0.0
  %1243 = vmatpush.msra.mxu0 0.0
  %1244 = vmatpush.msra.mxu0 0.0
  %1245 = vmatpush.msra.mxu0 %v1223
  %1246 = vmatmul.f32.gmra.mxu0 %v1225
  %v1247 = vpop.f32.mrf.mxu0
  %v1248 = vadd.f32 0.0, %v1247
  %1249 = vmatmul.f32.gmra.mxu0 %v1228
  %v1250 = vpop.f32.mrf.mxu0
  %v1251 = vadd.f32 0.0, %v1250
  %1252 = vdwg.mxu0
  %v1254 = vsel %vm187, %v982, 0
  %v1257 = vsel %vm187, %v1005, 0
  %1259 = vmatpush.msra.mxu0 0.0
  %1260 = vmatpush.msra.mxu0 0.0
  %1261 = vmatpush.msra.mxu0 0.0
  %1262 = vmatpush.msra.mxu0 0.0
  %1263 = vmatpush.msra.mxu0 0.0
  %1264 = vmatpush.msra.mxu0 0.0
  %1265 = vmatpush.msra.mxu0 0.0
  %1266 = vmatpush.msra.mxu0 0.0
  %1267 = vmatpush.msra.mxu0 0.0
  %1268 = vmatpush.msra.mxu0 0.0
  %1269 = vmatpush.msra.mxu0 0.0
  %1270 = vmatpush.msra.mxu0 0.0
  %1271 = vmatpush.msra.mxu0 0.0
  %1272 = vmatpush.msra.mxu0 0.0
  %1273 = vmatpush.msra.mxu0 0.0
  %1274 = vmatpush.msra.mxu0 %v1008
  %1275 = vmatmul.f32.gmra.mxu0 %v1254
  %v1276 = vpop.f32.mrf.mxu0
  %v1277 = vadd.f32 %v1248, %v1276
  %1278 = vmatmul.f32.gmra.mxu0 %v1257
  %v1279 = vpop.f32.mrf.mxu0
  %v1280 = vadd.f32 %v1251, %v1279
  %1281 = vdwg.mxu0
  %s1282 = scalar_lea.vmem %s7, 6
  %v1283 = vld [vmem:[%s1282] sm:$0x1]
  %v1285 = vperm.slane %v1283, 0
  %v1287 = vadd.f32 %v1277, %v1285
  %v1288 = vadd.f32 %v1280, %v1285
  %v1289 = vadd.f32 %v786, %v1287
  %v1290 = vadd.f32 %v787, %v1288
  %s1291 = scalar_lea.vmem %s7, 7
  %v1292 = vld [vmem:[%s1291] sm:$0x1]
  %s1293 = scalar_lea.vmem %s7, 8
  %v1294 = vld [vmem:[%s1293] sm:$0x1]
  %v1295 = vsel %vm95, %v1289, 0.0
  %1296 = vadd.xlane.f32.xlu0 %v1295
  %v1297 = vpop.xlane.xlu0 %1296
  %v1298 = vsel %vm95, %v1290, 0.0
  %1299 = vadd.xlane.f32.xlu0 %v1298
  %v1300 = vpop.xlane.xlu0 %1299
  %v1301 = vmul.f32 %v1297, %v606
  %v1302 = vmul.f32 %v1300, %v606
  %v1303 = vsub.f32 %v1289, %v1301
  %v1304 = vsub.f32 %v1290, %v1302
  %v1305 = vmul.f32 %v1303, %v1303
  %v1306 = vmul.f32 %v1304, %v1304
  %v1307 = vsel %vm95, %v1305, 0.0
  %1308 = vadd.xlane.f32.xlu0 %v1307
  %v1309 = vpop.xlane.xlu0 %1308
  %v1310 = vsel %vm95, %v1306, 0.0
  %1311 = vadd.xlane.f32.xlu0 %v1310
  %v1312 = vpop.xlane.xlu0 %1311
  %v1313 = vmul.f32 %v1309, %v606
  %v1314 = vmul.f32 %v1312, %v606
  %v1315 = vadd.f32 %v1313, 1e-05
  %v1316 = vadd.f32 %v1314, 1e-05
  %v1317 = vrsqrt.pop %v1315
  %v1318 = vmul.f32 %v1317, %v1315
  %v1319 = vmul.f32 %v1318, %v1317
  %v1320 = vmul.f32 0.5, %v1319
  %v1321 = vsub.f32 1.5, %v1320
  %v1322 = vmul.f32 %v1317, %v1321
  %vm1323 = vweird.f32 %v1315
  %vm1324 = vweird.f32 %v1317
  %vm1325 = vmor %vm1323, %vm1324
  %v1326 = vsel %vm1325, %v1317, %v1322
  %v1327 = vrsqrt.pop %v1316
  %v1328 = vmul.f32 %v1327, %v1316
  %v1329 = vmul.f32 %v1328, %v1327
  %v1330 = vmul.f32 0.5, %v1329
  %v1331 = vsub.f32 1.5, %v1330
  %v1332 = vmul.f32 %v1327, %v1331
  %vm1333 = vweird.f32 %v1316
  %vm1334 = vweird.f32 %v1327
  %vm1335 = vmor %vm1333, %vm1334
  %v1336 = vsel %vm1335, %v1327, %v1332
  %v1337 = vmul.f32 %v1303, %v1326
  %v1338 = vmul.f32 %v1304, %v1336
  %v1340 = vperm.slane %v1292, 0
  %v1342 = vmul.f32 %v1337, %v1340
  %v1343 = vmul.f32 %v1338, %v1340
  %v1345 = vperm.slane %v1294, 0
  %v1347 = vadd.f32 %v1342, %v1345
  %v1348 = vadd.f32 %v1343, %v1345
  %s1349 = scalar_lea.vmem %s8, 16
  %v1350 = vld [vmem:[%s1349] sm:$0xff]
  %v1351 = vld [vmem:[%s1349 + $0x8] sm:$0xff]
  %s1352 = scalar_lea.vmem %s9, 1
  %v1353 = vld [vmem:[%s1352] sm:$0x1]
  %v1355 = vperm.slane %v1353, 0
  %v1358 = vsel %vm95, %v1347, 0
  %v1361 = vsel %vm95, %v1348, 0
  %1363 = vmatpush.msra.mxu0 0.0
  %1364 = vmatpush.msra.mxu0 0.0
  %1365 = vmatpush.msra.mxu0 0.0
  %1366 = vmatpush.msra.mxu0 0.0
  %1367 = vmatpush.msra.mxu0 0.0
  %1368 = vmatpush.msra.mxu0 0.0
  %1369 = vmatpush.msra.mxu0 0.0
  %1370 = vmatpush.msra.mxu0 0.0
  %1371 = vmatpush.msra.mxu0 0.0
  %1372 = vmatpush.msra.mxu0 0.0
  %1373 = vmatpush.msra.mxu0 0.0
  %1374 = vmatpush.msra.mxu0 0.0
  %1375 = vmatpush.msra.mxu0 0.0
  %1376 = vmatpush.msra.mxu0 0.0
  %1377 = vmatpush.msra.mxu0 %v1351
  %1378 = vmatpush.msra.mxu0 %v1350
  %1379 = vmatmul.f32.gmra.mxu0 %v1358
  %v1380 = vpop.f32.mrf.mxu0
  %v1381 = vadd.f32 %v1355, %v1380
  %1382 = vmatmul.f32.gmra.mxu0 %v1361
  %v1383 = vpop.f32.mrf.mxu0
  %v1384 = vadd.f32 %v1355, %v1383
  %1385 = vdwg.mxu0
  %v1386 = vmax.f32 %v1381, 0.0
  %v1387 = vmax.f32 %v1384, 0.0
  %s1388 = scalar_lea.vmem %s10, 16
  %v1389 = vld [vmem:[%s1388] sm:$0xff]
  %v1390 = vld [vmem:[%s1388 + $0x8] sm:$0xff]
  %s1391 = scalar_lea.vmem %s7, 11
  %v1392 = vld [vmem:[%s1391] sm:$0x1]
  %v1394 = vperm.slane %v1392, 0
  %v1397 = vsel %vm95, %v1386, 0
  %v1400 = vsel %vm95, %v1387, 0
  %1402 = vmatpush.msra.mxu0 0.0
  %1403 = vmatpush.msra.mxu0 0.0
  %1404 = vmatpush.msra.mxu0 0.0
  %1405 = vmatpush.msra.mxu0 0.0
  %1406 = vmatpush.msra.mxu0 0.0
  %1407 = vmatpush.msra.mxu0 0.0
  %1408 = vmatpush.msra.mxu0 0.0
  %1409 = vmatpush.msra.mxu0 0.0
  %1410 = vmatpush.msra.mxu0 0.0
  %1411 = vmatpush.msra.mxu0 0.0
  %1412 = vmatpush.msra.mxu0 0.0
  %1413 = vmatpush.msra.mxu0 0.0
  %1414 = vmatpush.msra.mxu0 0.0
  %1415 = vmatpush.msra.mxu0 0.0
  %1416 = vmatpush.msra.mxu0 %v1390
  %1417 = vmatpush.msra.mxu0 %v1389
  %1418 = vmatmul.f32.gmra.mxu0 %v1397
  %v1419 = vpop.f32.mrf.mxu0
  %v1420 = vadd.f32 %v1394, %v1419
  %1421 = vmatmul.f32.gmra.mxu0 %v1400
  %v1422 = vpop.f32.mrf.mxu0
  %v1423 = vadd.f32 %v1394, %v1422
  %1424 = vdwg.mxu0
  %v1425 = vadd.f32 %v1347, %v1420
  %v1426 = vadd.f32 %v1348, %v1423
  %s1427 = scalar_lea.vmem %s7, 9
  %v1428 = vld [vmem:[%s1427] sm:$0x1]
  %s1429 = scalar_lea.vmem %s7, 10
  %v1430 = vld [vmem:[%s1429] sm:$0x1]
  %v1431 = vsel %vm95, %v1425, 0.0
  %1432 = vadd.xlane.f32.xlu0 %v1431
  %v1433 = vpop.xlane.xlu0 %1432
  %v1434 = vsel %vm95, %v1426, 0.0
  %1435 = vadd.xlane.f32.xlu0 %v1434
  %v1436 = vpop.xlane.xlu0 %1435
  %v1437 = vmul.f32 %v1433, %v606
  %v1438 = vmul.f32 %v1436, %v606
  %v1439 = vsub.f32 %v1425, %v1437
  %v1440 = vsub.f32 %v1426, %v1438
  %v1441 = vmul.f32 %v1439, %v1439
  %v1442 = vmul.f32 %v1440, %v1440
  %v1443 = vsel %vm95, %v1441, 0.0
  %1444 = vadd.xlane.f32.xlu0 %v1443
  %v1445 = vpop.xlane.xlu0 %1444
  %v1446 = vsel %vm95, %v1442, 0.0
  %1447 = vadd.xlane.f32.xlu0 %v1446
  %v1448 = vpop.xlane.xlu0 %1447
  %v1449 = vmul.f32 %v1445, %v606
  %v1450 = vmul.f32 %v1448, %v606
  %v1451 = vadd.f32 %v1449, 1e-05
  %v1452 = vadd.f32 %v1450, 1e-05
  %v1453 = vrsqrt.pop %v1451
  %v1454 = vmul.f32 %v1453, %v1451
  %v1455 = vmul.f32 %v1454, %v1453
  %v1456 = vmul.f32 0.5, %v1455
  %v1457 = vsub.f32 1.5, %v1456
  %v1458 = vmul.f32 %v1453, %v1457
  %vm1459 = vweird.f32 %v1451
  %vm1460 = vweird.f32 %v1453
  %vm1461 = vmor %vm1459, %vm1460
  %v1462 = vsel %vm1461, %v1453, %v1458
  %v1463 = vrsqrt.pop %v1452
  %v1464 = vmul.f32 %v1463, %v1452
  %v1465 = vmul.f32 %v1464, %v1463
  %v1466 = vmul.f32 0.5, %v1465
  %v1467 = vsub.f32 1.5, %v1466
  %v1468 = vmul.f32 %v1463, %v1467
  %vm1469 = vweird.f32 %v1452
  %vm1470 = vweird.f32 %v1463
  %vm1471 = vmor %vm1469, %vm1470
  %v1472 = vsel %vm1471, %v1463, %v1468
  %v1473 = vmul.f32 %v1439, %v1462
  %v1474 = vmul.f32 %v1440, %v1472
  %v1476 = vperm.slane %v1428, 0
  %v1478 = vmul.f32 %v1473, %v1476
  %v1479 = vmul.f32 %v1474, %v1476
  %v1481 = vperm.slane %v1430, 0
  %v1483 = vadd.f32 %v1478, %v1481
  %v1484 = vadd.f32 %v1479, %v1481
  %v1485 = vld [vmem:[%s11] sm:$0xff]
  %v1486 = vld [vmem:[%s11 + $0x8] sm:$0xff]
  %v1487 = vld [vmem:[%s12] sm:$0x1]
  %v1489 = vperm.slane %v1487, 0
  %v1492 = vsel %vm95, %v1483, 0
  %v1495 = vsel %vm95, %v1484, 0
  %1497 = vmatpush.msra.mxu0 0.0
  %1498 = vmatpush.msra.mxu0 0.0
  %1499 = vmatpush.msra.mxu0 0.0
  %1500 = vmatpush.msra.mxu0 0.0
  %1501 = vmatpush.msra.mxu0 0.0
  %1502 = vmatpush.msra.mxu0 0.0
  %1503 = vmatpush.msra.mxu0 0.0
  %1504 = vmatpush.msra.mxu0 0.0
  %1505 = vmatpush.msra.mxu0 0.0
  %1506 = vmatpush.msra.mxu0 0.0
  %1507 = vmatpush.msra.mxu0 0.0
  %1508 = vmatpush.msra.mxu0 0.0
  %1509 = vmatpush.msra.mxu0 0.0
  %1510 = vmatpush.msra.mxu0 0.0
  %1511 = vmatpush.msra.mxu0 %v1486
  %1512 = vmatpush.msra.mxu0 %v1485
  %1513 = vmatmul.f32.gmra.mxu0 %v1492
  %v1514 = vpop.f32.mrf.mxu0
  %v1515 = vadd.f32 %v1489, %v1514
  %1516 = vmatmul.f32.gmra.mxu0 %v1495
  %v1517 = vpop.f32.mrf.mxu0
  %v1518 = vadd.f32 %v1489, %v1517
  %1519 = vdwg.mxu0
  %1520 = vst.msk [vmem:[%s13] sm:$0xff] %vm187, %v1515
  %1521 = vst.msk [vmem:[%s13 + $0x8] sm:$0xff] %vm187, %v1518
  // Predicated region
  $region54: #{tpu_custom_call.1} parent=0 // pred_check
    _
  $region55: #{tpu_custom_call.1} parent=0 // pred_check_branch
    %1523 = sbr.rel (0) target = $region57
  $region56: #{tpu_custom_call.1} parent=0 // pred_region
    _
  $region57: #{tpu_custom_call.1} parent=0 // pred_fallthru
    _
  // Predicated region
  $region58: #{tpu_custom_call.1} parent=0 // pred_check
    _
  $region59: #{tpu_custom_call.1} parent=0 // pred_check_branch
    %1525 = sbr.rel (0) target = $region61
  $region60: #{tpu_custom_call.1} parent=0 // pred_region
    _
  $region61: #{tpu_custom_call.1} parent=0 // pred_fallthru
    _

</llo_original>
